<compile_context>
chip_gen: v7x
topology: tpu7x:2x2x1
jax: 0.10.0
libtpu: 0.0.40
codegen_flags: <defaults>
</compile_context>

<pallas_src>
import functools

import jax
import jax.numpy as jnp
from jax import lax
from jax.experimental import pallas as pl
from jax.experimental.pallas import tpu as pltpu


# ----------------------------------------------------------------------------
# Fused kernel: run the whole stage/repeat chain of 3x3 "same" conv+bias+ReLU
# with the activation held on-chip.
#   x_ref : (NG, H, GWC)              NG lane-groups of G lane-packed images
#   w_ref : (n_stages, GWC, 3*GWC)    per-stage banded tap matrices [kh0|kh1|kh2]
#   b_ref : (n_stages, 1, GWC)        per-stage bias tiled across (G, W)
#   o_ref : (NG, H, GWC)              output
# ----------------------------------------------------------------------------
def _fused_ddn_kernel(x_ref, w_ref, b_ref, o_ref, *, H, GWC, NG, n_stages, repeatn):
    f32 = jnp.float32
    Hp = H + 2                      # per-group rows incl. top/bottom zero halo
    Mp = NG * Hp

    zrow = jnp.zeros((1, GWC), f32)  # hoisted (JAX does not CSE broadcasts in loops)

    # Build the stacked, vertically padded activation once per grid step:
    # [zero row, H image rows, zero row] per lane-group, stacked along sublanes.
    parts = []
    for g in range(NG):
        parts.extend([zrow, x_ref[g].astype(f32), zrow])
    dp = jnp.concatenate(parts, axis=0)                       # (Mp, GWC)

    # Hoisted image-row mask: separator/halo rows stay exactly zero every repeat,
    # so they serve as the "same" padding for both neighbouring images.
    ri = lax.broadcasted_iota(jnp.int32, (Mp, 1), 0) % Hp
    valid = jnp.logical_and(ri != 0, ri != Hp - 1)            # (Mp, 1)

    for s in range(n_stages):                                 # tiny static stage loop
        w_s = w_ref[s].astype(f32)                            # (GWC, 3*GWC)
        b_s = b_ref[s].astype(f32)                            # (1, GWC)

        def conv_step(_, d, w_s=w_s, b_s=b_s):
            # Single MXU call evaluates all three kh tap-rows at every row:
            #   p[:, kh*GWC:(kh+1)*GWC] = d @ M_kh   (conv over W folded into M_kh)
            p = jnp.dot(d, w_s, preferred_element_type=f32)   # (Mp, 3*GWC)
            # Combine kh taps with two sublane shifts (lane slices are 128-aligned).
            y = (jnp.concatenate([zrow, p[:Mp - 1, 0:GWC]], axis=0)          # kh=0
                 + p[:, GWC:2 * GWC]                                          # kh=1
                 + jnp.concatenate([p[1:, 2 * GWC:3 * GWC], zrow], axis=0))   # kh=2
            # Bias + ReLU on image rows; re-zero halo/separator rows.
            return jnp.where(valid, jnp.maximum(y + b_s, 0.0), 0.0)

        dp = lax.fori_loop(0, repeatn, conv_step, dp, unroll=True)

    for g in range(NG):
        o_ref[g] = dp[g * Hp + 1: g * Hp + 1 + H, :].astype(o_ref.dtype)


# ----------------------------------------------------------------------------
# Wrapper: one pallas_call for the whole module forward.
# ----------------------------------------------------------------------------
@functools.partial(jax.jit, static_argnames=("repeatn", "groups_per_block"))
def hierarchical_ddn_forward(x_nchw, w_all, b_all, repeatn=5, groups_per_block=1):
    B, C, H, W = x_nchw.shape
    WC = W * C
    n_stages = w_all.shape[0]
    GWC = w_all.shape[1]
    G = GWC // WC                    # images packed side-by-side along lanes
    NG = groups_per_block            # lane-groups stacked along sublanes per step
    Bt = G * NG                      # images per grid step

    # Pad batch to a multiple of Bt with zero images (sliced away at the end).
    Bpad = ((B + Bt - 1) // Bt) * Bt
    if Bpad != B:
        pad = jnp.zeros((Bpad - B, C, H, W), x_nchw.dtype)
        x_nchw = jnp.concatenate([x_nchw, pad], axis=0)
    n_groups = Bpad // G

    # NCHW -> lane-packed (n_groups, H, G*W*C) in a single fused transpose.
    xl = jnp.transpose(x_nchw.reshape(n_groups, G, C, H, W),
                       (0, 3, 1, 4, 2)).reshape(n_groups, H, GWC)

    kernel = functools.partial(_fused_ddn_kernel, H=H, GWC=GWC, NG=NG,
                               n_stages=n_stages, repeatn=repeatn)

    # VMEM budget tied to real bytes (in/out double-buffered blocks, weights,
    # temporaries) with headroom, capped well below every generation's limit.
    blk_bytes = NG * H * GWC * 4
    w_bytes = int(w_all.size) * 4 + int(b_all.size) * 4
    vmem_limit = int(min(max(16 * blk_bytes + 2 * w_bytes + (4 << 20),
                             16 << 20), 32 << 20))

    out = pl.pallas_call(
        kernel,
        out_shape=jax.ShapeDtypeStruct((n_groups, H, GWC), x_nchw.dtype),
        grid_spec=pltpu.PrefetchScalarGridSpec(
            num_scalar_prefetch=0,
            grid=(n_groups // NG,),
            in_specs=[
                pl.BlockSpec((NG, H, GWC), lambda i: (i, 0, 0)),
                pl.BlockSpec(tuple(w_all.shape), lambda i: (0, 0, 0)),
                pl.BlockSpec(tuple(b_all.shape), lambda i: (0, 0, 0)),
            ],
            out_specs=pl.BlockSpec((NG, H, GWC), lambda i: (i, 0, 0)),
        ),
        compiler_params=pltpu.CompilerParams(
            dimension_semantics=("parallel",),   # splits blocks across v7x's 2 TCs
            vmem_limit_bytes=vmem_limit),
    )(xl, w_all, b_all)

    # Lane-packed -> NCHW (PyTorch layout), drop batch padding.
    out = jnp.transpose(out.reshape(n_groups, H, G, W, C),
                        (0, 2, 4, 1, 3)).reshape(Bpad, C, H, W)
    return out[:B]


# ----------------------------------------------------------------------------
# Parameter packing: PyTorch Conv2d (Cout, Cin, 3, 3) + bias (Cout,) ->
# per-kh banded matrices (conv over W folded in), block-diag over the G
# lane-packed images, concatenated along N:   (G*W*C, 3*G*W*C), plus bias row.
# ----------------------------------------------------------------------------
def pack_stage_params(w_oihw, b, W, G):
    Cout, Cin, _, _ = w_oihw.shape
    taps = jnp.transpose(w_oihw, (2, 3, 1, 0)).astype(jnp.float32)  # (3,3,Cin,Cout)
    wi = jnp.arange(W)[:, None]
    wo = jnp.arange(W)[None, :]
    eye_g = jnp.eye(G, dtype=jnp.float32)
    mats = []
    for kh in range(3):
        m = jnp.zeros((W, W, Cin, Cout), jnp.float32)
        for kw in range(3):
            sel = ((wi - wo) == (kw - 1)).astype(jnp.float32)       # banded selector
            m = m + sel[:, :, None, None] * taps[kh, kw][None, None, :, :]
        mk = jnp.transpose(m, (0, 2, 1, 3)).reshape(W * Cin, W * Cout)
        mats.append(jnp.kron(eye_g, mk))                            # (G*WC, G*WC)
    wcat = jnp.concatenate(mats, axis=1)                            # (G*WC, 3*G*WC)
    brow = jnp.tile(b.astype(jnp.float32), (G * W,)).reshape(1, G * W * Cout)
    return wcat, brow


class HierarchicalDDNPallas:
    """Mirror of HierarchicalDiscreteDistributionNetwork.forward."""

    def __init__(self, w_all, b_all, repeatn=5, groups_per_block=1):
        self.w_all = w_all            # (n_stages, G*W*C, 3*G*W*C)
        self.b_all = b_all            # (n_stages, 1, G*W*C)
        self.repeatn = repeatn
        self.groups_per_block = groups_per_block

    def __call__(self, x_nchw):
        return hierarchical_ddn_forward(x_nchw, self.w_all, self.b_all,
                                        repeatn=self.repeatn,
                                        groups_per_block=self.groups_per_block)


# ----------------------------------------------------------------------------
# Pure-JAX reference (correctness check only).
# ----------------------------------------------------------------------------
def reference_forward(x_nchw, raw_stage_params, repeatn):
    d = x_nchw
    for (w, b) in raw_stage_params:
        for _ in range(repeatn):
            d = lax.conv_general_dilated(
                d, w, window_strides=(1, 1), padding="SAME",
                dimension_numbers=("NCHW", "OIHW", "NCHW"),
                precision=lax.Precision.HIGHEST)
            d = jnp.maximum(d + b.reshape(1, -1, 1, 1), 0.0)
    return d


if __name__ == "__main__":
    B, C, H, W = 2, 4, 16, 16
    n_stages, repeatn = 2, 5
    G = max(1, 128 // (W * C))        # images packed per 128-lane row (2 here)

    key = jax.random.PRNGKey(0)
    kx, kp = jax.random.split(key)
    x = jax.random.normal(kx, (B, C, H, W), dtype=jnp.float32)

    # Deterministic PyTorch-style init: U(-1/sqrt(fan_in), 1/sqrt(fan_in))
    bound = 1.0 / float((C * 3 * 3) ** 0.5)
    raw_params, packed_w, packed_b = [], [], []
    for _ in range(n_stages):
        kp, kw_, kb_ = jax.random.split(kp, 3)
        w = jax.random.uniform(kw_, (C, C, 3, 3), jnp.float32, -bound, bound)
        b = jax.random.uniform(kb_, (C,), jnp.float32, -bound, bound)
        raw_params.append((w, b))
        wm, bt = pack_stage_params(w, b, W, G)
        packed_w.append(wm)
        packed_b.append(bt)
    w_all = jnp.stack(packed_w, axis=0)     # (n_stages, G*W*C, 3*G*W*C)
    b_all = jnp.stack(packed_b, axis=0)     # (n_stages, 1, G*W*C)

    model = HierarchicalDDNPallas(w_all, b_all, repeatn=repeatn, groups_per_block=1)
    out = jax.block_until_ready(model(x))

    ref = jax.block_until_ready(reference_forward(x, raw_params, repeatn))
    assert out.shape == (B, C, H, W), out.shape
    max_err = float(jnp.max(jnp.abs(out - ref)))
    assert bool(jnp.allclose(out, ref, rtol=1e-3, atol=1e-4)), f"mismatch: {max_err}"

    print("KERNEL_OK")
</pallas_src>

<mosaic_0001>
module attributes {stable_mosaic.version = 11 : i64} {
  func.func @_fused_ddn_kernel(%arg0: i32, %arg1: memref<1x16x128xf32, #tpu.memory_space<vmem>>, %arg2: memref<2x128x384xf32, #tpu.memory_space<vmem>>, %arg3: memref<2x1x128xf32, #tpu.memory_space<vmem>>, %arg4: memref<1x16x128xf32, #tpu.memory_space<vmem>>) attributes {dimension_semantics = [#tpu.dimension_semantics<parallel>], iteration_bounds = array<i64: 1>, scalar_prefetch = 0 : i64, scratch_operands = 0 : i64, tpu.core_type = #tpu.core_type<tc>, window_params = [{transform_indices = @transform_0, window_bounds = array<i64: 1, 16, 128>}, {pipeline_mode = #tpu.pipeline_mode<synchronous>, transform_indices = @transform_1, window_bounds = array<i64: 2, 128, 384>}, {pipeline_mode = #tpu.pipeline_mode<synchronous>, transform_indices = @transform_2, window_bounds = array<i64: 2, 1, 128>}, {transform_indices = @transform_3, window_bounds = array<i64: 1, 16, 128>}]} {
    %cst = arith.constant 0.000000e+00 : f32
    %0 = vector.broadcast %cst : f32 to vector<1x128xf32>
    %c0 = arith.constant 0 : index
    %c0_0 = arith.constant 0 : index
    %c0_1 = arith.constant 0 : index
    %1 = vector.load %arg1[%c0, %c0_0, %c0_1] : memref<1x16x128xf32, #tpu.memory_space<vmem>>, vector<1x16x128xf32>
    %2 = vector.shape_cast %1 : vector<1x16x128xf32> to vector<16x128xf32>
    %3 = tpu.concatenate %0, %2, %0 in 0 : vector<1x128xf32>, vector<16x128xf32>, vector<1x128xf32> -> vector<18x128xf32>
    %4 = tpu.iota {dimensions = array<i32: 0>} : vector<18x1xi32>
    %c18_i32 = arith.constant 18 : i32
    %c0_i32 = arith.constant 0 : i32
    %5 = arith.cmpi eq, %c18_i32, %c0_i32 : i32
    %c1_i32 = arith.constant 1 : i32
    %6 = arith.select %5, %c1_i32, %c18_i32 : i32
    %7 = vector.broadcast %6 : i32 to vector<18x1xi32>
    %8 = arith.remsi %4, %7 : vector<18x1xi32>
    %c0_i32_2 = arith.constant 0 : i32
    %9 = vector.broadcast %c0_i32_2 : i32 to vector<18x1xi32>
    %10 = arith.cmpi ne, %8, %9 : vector<18x1xi32>
    %c0_i32_3 = arith.constant 0 : i32
    %11 = vector.broadcast %c0_i32_3 : i32 to vector<18x1xi32>
    %12 = arith.cmpi slt, %8, %11 : vector<18x1xi32>
    %c0_i32_4 = arith.constant 0 : i32
    %13 = arith.cmpi slt, %6, %c0_i32_4 : i32
    %14 = vector.broadcast %13 : i1 to vector<18x1xi1>
    %15 = vector.broadcast %14 : vector<18x1xi1> to vector<18x1xi1>
    %16 = arith.xori %12, %15 : vector<18x1xi1>
    %17 = arith.andi %16, %10 : vector<18x1xi1>
    %18 = vector.broadcast %6 : i32 to vector<18x1xi32>
    %19 = arith.addi %8, %18 : vector<18x1xi32>
    %20 = arith.select %17, %19, %8 : vector<18x1xi1>, vector<18x1xi32>
    %c0_i32_5 = arith.constant 0 : i32
    %21 = vector.broadcast %c0_i32_5 : i32 to vector<18x1xi32>
    %22 = arith.cmpi ne, %20, %21 : vector<18x1xi32>
    %c17_i32 = arith.constant 17 : i32
    %23 = vector.broadcast %c17_i32 : i32 to vector<18x1xi32>
    %24 = arith.cmpi ne, %20, %23 : vector<18x1xi32>
    %25 = arith.andi %22, %24 : vector<18x1xi1>
    %c0_6 = arith.constant 0 : index
    %c0_7 = arith.constant 0 : index
    %c0_8 = arith.constant 0 : index
    %26 = vector.load %arg2[%c0_6, %c0_7, %c0_8] : memref<2x128x384xf32, #tpu.memory_space<vmem>>, vector<1x128x384xf32>
    %27 = vector.shape_cast %26 : vector<1x128x384xf32> to vector<128x384xf32>
    %c0_9 = arith.constant 0 : index
    %c0_10 = arith.constant 0 : index
    %c0_11 = arith.constant 0 : index
    %28 = vector.load %arg3[%c0_9, %c0_10, %c0_11] : memref<2x1x128xf32, #tpu.memory_space<vmem>>, vector<1x1x128xf32>
    %29 = vector.shape_cast %28 : vector<1x1x128xf32> to vector<1x128xf32>
    %c0_i32_12 = arith.constant 0 : i32
    %cst_13 = arith.constant dense<0.000000e+00> : vector<18x384xf32>
    %30 = tpu.matmul %3, %27, %cst_13 {dimension_numbers = #tpu.dot_dimension_numbers<[1], [0], [0], [1], [0, 0, 1, 1], [], []>} : vector<18x128xf32>, vector<128x384xf32>, vector<18x384xf32> -> vector<18x384xf32>
    %31 = vector.extract_strided_slice %30 {offsets = [0, 0], sizes = [17, 128], strides = [1, 1]} : vector<18x384xf32> to vector<17x128xf32>
    %32 = tpu.concatenate %0, %31 in 0 : vector<1x128xf32>, vector<17x128xf32> -> vector<18x128xf32>
    %33 = vector.extract_strided_slice %30 {offsets = [0, 128], sizes = [18, 128], strides = [1, 1]} : vector<18x384xf32> to vector<18x128xf32>
    %34 = arith.addf %32, %33 : vector<18x128xf32>
    %35 = vector.extract_strided_slice %30 {offsets = [1, 256], sizes = [17, 128], strides = [1, 1]} : vector<18x384xf32> to vector<17x128xf32>
    %36 = tpu.concatenate %35, %0 in 0 : vector<17x128xf32>, vector<1x128xf32> -> vector<18x128xf32>
    %37 = arith.addf %34, %36 : vector<18x128xf32>
    %38 = vector.broadcast %29 : vector<1x128xf32> to vector<18x128xf32>
    %39 = arith.addf %37, %38 : vector<18x128xf32>
    %cst_14 = arith.constant 0.000000e+00 : f32
    %40 = vector.broadcast %cst_14 : f32 to vector<18x128xf32>
    %41 = arith.maximumf %39, %40 : vector<18x128xf32>
    %cst_15 = arith.constant 0.000000e+00 : f32
    %42 = vector.shape_cast %25 : vector<18x1xi1> to vector<18x1xi1>
    %43 = vector.broadcast %42 : vector<18x1xi1> to vector<18x128xi1>
    %44 = vector.broadcast %cst_15 : f32 to vector<18x128xf32>
    %45 = arith.select %43, %41, %44 : vector<18x128xi1>, vector<18x128xf32>
    %c1_i32_16 = arith.constant 1 : i32
    %cst_17 = arith.constant dense<0.000000e+00> : vector<18x384xf32>
    %46 = tpu.matmul %45, %27, %cst_17 {dimension_numbers = #tpu.dot_dimension_numbers<[1], [0], [0], [1], [0, 0, 1, 1], [], []>} : vector<18x128xf32>, vector<128x384xf32>, vector<18x384xf32> -> vector<18x384xf32>
    %47 = vector.extract_strided_slice %46 {offsets = [0, 0], sizes = [17, 128], strides = [1, 1]} : vector<18x384xf32> to vector<17x128xf32>
    %48 = tpu.concatenate %0, %47 in 0 : vector<1x128xf32>, vector<17x128xf32> -> vector<18x128xf32>
    %49 = vector.extract_strided_slice %46 {offsets = [0, 128], sizes = [18, 128], strides = [1, 1]} : vector<18x384xf32> to vector<18x128xf32>
    %50 = arith.addf %48, %49 : vector<18x128xf32>
    %51 = vector.extract_strided_slice %46 {offsets = [1, 256], sizes = [17, 128], strides = [1, 1]} : vector<18x384xf32> to vector<17x128xf32>
    %52 = tpu.concatenate %51, %0 in 0 : vector<17x128xf32>, vector<1x128xf32> -> vector<18x128xf32>
    %53 = arith.addf %50, %52 : vector<18x128xf32>
    %54 = vector.broadcast %29 : vector<1x128xf32> to vector<18x128xf32>
    %55 = arith.addf %53, %54 : vector<18x128xf32>
    %cst_18 = arith.constant 0.000000e+00 : f32
    %56 = vector.broadcast %cst_18 : f32 to vector<18x128xf32>
    %57 = arith.maximumf %55, %56 : vector<18x128xf32>
    %cst_19 = arith.constant 0.000000e+00 : f32
    %58 = vector.shape_cast %25 : vector<18x1xi1> to vector<18x1xi1>
    %59 = vector.broadcast %58 : vector<18x1xi1> to vector<18x128xi1>
    %60 = vector.broadcast %cst_19 : f32 to vector<18x128xf32>
    %61 = arith.select %59, %57, %60 : vector<18x128xi1>, vector<18x128xf32>
    %c2_i32 = arith.constant 2 : i32
    %cst_20 = arith.constant dense<0.000000e+00> : vector<18x384xf32>
    %62 = tpu.matmul %61, %27, %cst_20 {dimension_numbers = #tpu.dot_dimension_numbers<[1], [0], [0], [1], [0, 0, 1, 1], [], []>} : vector<18x128xf32>, vector<128x384xf32>, vector<18x384xf32> -> vector<18x384xf32>
    %63 = vector.extract_strided_slice %62 {offsets = [0, 0], sizes = [17, 128], strides = [1, 1]} : vector<18x384xf32> to vector<17x128xf32>
    %64 = tpu.concatenate %0, %63 in 0 : vector<1x128xf32>, vector<17x128xf32> -> vector<18x128xf32>
    %65 = vector.extract_strided_slice %62 {offsets = [0, 128], sizes = [18, 128], strides = [1, 1]} : vector<18x384xf32> to vector<18x128xf32>
    %66 = arith.addf %64, %65 : vector<18x128xf32>
    %67 = vector.extract_strided_slice %62 {offsets = [1, 256], sizes = [17, 128], strides = [1, 1]} : vector<18x384xf32> to vector<17x128xf32>
    %68 = tpu.concatenate %67, %0 in 0 : vector<17x128xf32>, vector<1x128xf32> -> vector<18x128xf32>
    %69 = arith.addf %66, %68 : vector<18x128xf32>
    %70 = vector.broadcast %29 : vector<1x128xf32> to vector<18x128xf32>
    %71 = arith.addf %69, %70 : vector<18x128xf32>
    %cst_21 = arith.constant 0.000000e+00 : f32
    %72 = vector.broadcast %cst_21 : f32 to vector<18x128xf32>
    %73 = arith.maximumf %71, %72 : vector<18x128xf32>
    %cst_22 = arith.constant 0.000000e+00 : f32
    %74 = vector.shape_cast %25 : vector<18x1xi1> to vector<18x1xi1>
    %75 = vector.broadcast %74 : vector<18x1xi1> to vector<18x128xi1>
    %76 = vector.broadcast %cst_22 : f32 to vector<18x128xf32>
    %77 = arith.select %75, %73, %76 : vector<18x128xi1>, vector<18x128xf32>
    %c3_i32 = arith.constant 3 : i32
    %cst_23 = arith.constant dense<0.000000e+00> : vector<18x384xf32>
    %78 = tpu.matmul %77, %27, %cst_23 {dimension_numbers = #tpu.dot_dimension_numbers<[1], [0], [0], [1], [0, 0, 1, 1], [], []>} : vector<18x128xf32>, vector<128x384xf32>, vector<18x384xf32> -> vector<18x384xf32>
    %79 = vector.extract_strided_slice %78 {offsets = [0, 0], sizes = [17, 128], strides = [1, 1]} : vector<18x384xf32> to vector<17x128xf32>
    %80 = tpu.concatenate %0, %79 in 0 : vector<1x128xf32>, vector<17x128xf32> -> vector<18x128xf32>
    %81 = vector.extract_strided_slice %78 {offsets = [0, 128], sizes = [18, 128], strides = [1, 1]} : vector<18x384xf32> to vector<18x128xf32>
    %82 = arith.addf %80, %81 : vector<18x128xf32>
    %83 = vector.extract_strided_slice %78 {offsets = [1, 256], sizes = [17, 128], strides = [1, 1]} : vector<18x384xf32> to vector<17x128xf32>
    %84 = tpu.concatenate %83, %0 in 0 : vector<17x128xf32>, vector<1x128xf32> -> vector<18x128xf32>
    %85 = arith.addf %82, %84 : vector<18x128xf32>
    %86 = vector.broadcast %29 : vector<1x128xf32> to vector<18x128xf32>
    %87 = arith.addf %85, %86 : vector<18x128xf32>
    %cst_24 = arith.constant 0.000000e+00 : f32
    %88 = vector.broadcast %cst_24 : f32 to vector<18x128xf32>
    %89 = arith.maximumf %87, %88 : vector<18x128xf32>
    %cst_25 = arith.constant 0.000000e+00 : f32
    %90 = vector.shape_cast %25 : vector<18x1xi1> to vector<18x1xi1>
    %91 = vector.broadcast %90 : vector<18x1xi1> to vector<18x128xi1>
    %92 = vector.broadcast %cst_25 : f32 to vector<18x128xf32>
    %93 = arith.select %91, %89, %92 : vector<18x128xi1>, vector<18x128xf32>
    %c4_i32 = arith.constant 4 : i32
    %cst_26 = arith.constant dense<0.000000e+00> : vector<18x384xf32>
    %94 = tpu.matmul %93, %27, %cst_26 {dimension_numbers = #tpu.dot_dimension_numbers<[1], [0], [0], [1], [0, 0, 1, 1], [], []>} : vector<18x128xf32>, vector<128x384xf32>, vector<18x384xf32> -> vector<18x384xf32>
    %95 = vector.extract_strided_slice %94 {offsets = [0, 0], sizes = [17, 128], strides = [1, 1]} : vector<18x384xf32> to vector<17x128xf32>
    %96 = tpu.concatenate %0, %95 in 0 : vector<1x128xf32>, vector<17x128xf32> -> vector<18x128xf32>
    %97 = vector.extract_strided_slice %94 {offsets = [0, 128], sizes = [18, 128], strides = [1, 1]} : vector<18x384xf32> to vector<18x128xf32>
    %98 = arith.addf %96, %97 : vector<18x128xf32>
    %99 = vector.extract_strided_slice %94 {offsets = [1, 256], sizes = [17, 128], strides = [1, 1]} : vector<18x384xf32> to vector<17x128xf32>
    %100 = tpu.concatenate %99, %0 in 0 : vector<17x128xf32>, vector<1x128xf32> -> vector<18x128xf32>
    %101 = arith.addf %98, %100 : vector<18x128xf32>
    %102 = vector.broadcast %29 : vector<1x128xf32> to vector<18x128xf32>
    %103 = arith.addf %101, %102 : vector<18x128xf32>
    %cst_27 = arith.constant 0.000000e+00 : f32
    %104 = vector.broadcast %cst_27 : f32 to vector<18x128xf32>
    %105 = arith.maximumf %103, %104 : vector<18x128xf32>
    %cst_28 = arith.constant 0.000000e+00 : f32
    %106 = vector.shape_cast %25 : vector<18x1xi1> to vector<18x1xi1>
    %107 = vector.broadcast %106 : vector<18x1xi1> to vector<18x128xi1>
    %108 = vector.broadcast %cst_28 : f32 to vector<18x128xf32>
    %109 = arith.select %107, %105, %108 : vector<18x128xi1>, vector<18x128xf32>
    %c1 = arith.constant 1 : index
    %c0_29 = arith.constant 0 : index
    %c0_30 = arith.constant 0 : index
    %110 = vector.load %arg2[%c1, %c0_29, %c0_30] : memref<2x128x384xf32, #tpu.memory_space<vmem>>, vector<1x128x384xf32>
    %111 = vector.shape_cast %110 : vector<1x128x384xf32> to vector<128x384xf32>
    %c1_31 = arith.constant 1 : index
    %c0_32 = arith.constant 0 : index
    %c0_33 = arith.constant 0 : index
    %112 = vector.load %arg3[%c1_31, %c0_32, %c0_33] : memref<2x1x128xf32, #tpu.memory_space<vmem>>, vector<1x1x128xf32>
    %113 = vector.shape_cast %112 : vector<1x1x128xf32> to vector<1x128xf32>
    %c0_i32_34 = arith.constant 0 : i32
    %cst_35 = arith.constant dense<0.000000e+00> : vector<18x384xf32>
    %114 = tpu.matmul %109, %111, %cst_35 {dimension_numbers = #tpu.dot_dimension_numbers<[1], [0], [0], [1], [0, 0, 1, 1], [], []>} : vector<18x128xf32>, vector<128x384xf32>, vector<18x384xf32> -> vector<18x384xf32>
    %115 = vector.extract_strided_slice %114 {offsets = [0, 0], sizes = [17, 128], strides = [1, 1]} : vector<18x384xf32> to vector<17x128xf32>
    %116 = tpu.concatenate %0, %115 in 0 : vector<1x128xf32>, vector<17x128xf32> -> vector<18x128xf32>
    %117 = vector.extract_strided_slice %114 {offsets = [0, 128], sizes = [18, 128], strides = [1, 1]} : vector<18x384xf32> to vector<18x128xf32>
    %118 = arith.addf %116, %117 : vector<18x128xf32>
    %119 = vector.extract_strided_slice %114 {offsets = [1, 256], sizes = [17, 128], strides = [1, 1]} : vector<18x384xf32> to vector<17x128xf32>
    %120 = tpu.concatenate %119, %0 in 0 : vector<17x128xf32>, vector<1x128xf32> -> vector<18x128xf32>
    %121 = arith.addf %118, %120 : vector<18x128xf32>
    %122 = vector.broadcast %113 : vector<1x128xf32> to vector<18x128xf32>
    %123 = arith.addf %121, %122 : vector<18x128xf32>
    %cst_36 = arith.constant 0.000000e+00 : f32
    %124 = vector.broadcast %cst_36 : f32 to vector<18x128xf32>
    %125 = arith.maximumf %123, %124 : vector<18x128xf32>
    %cst_37 = arith.constant 0.000000e+00 : f32
    %126 = vector.shape_cast %25 : vector<18x1xi1> to vector<18x1xi1>
    %127 = vector.broadcast %126 : vector<18x1xi1> to vector<18x128xi1>
    %128 = vector.broadcast %cst_37 : f32 to vector<18x128xf32>
    %129 = arith.select %127, %125, %128 : vector<18x128xi1>, vector<18x128xf32>
    %c1_i32_38 = arith.constant 1 : i32
    %cst_39 = arith.constant dense<0.000000e+00> : vector<18x384xf32>
    %130 = tpu.matmul %129, %111, %cst_39 {dimension_numbers = #tpu.dot_dimension_numbers<[1], [0], [0], [1], [0, 0, 1, 1], [], []>} : vector<18x128xf32>, vector<128x384xf32>, vector<18x384xf32> -> vector<18x384xf32>
    %131 = vector.extract_strided_slice %130 {offsets = [0, 0], sizes = [17, 128], strides = [1, 1]} : vector<18x384xf32> to vector<17x128xf32>
    %132 = tpu.concatenate %0, %131 in 0 : vector<1x128xf32>, vector<17x128xf32> -> vector<18x128xf32>
    %133 = vector.extract_strided_slice %130 {offsets = [0, 128], sizes = [18, 128], strides = [1, 1]} : vector<18x384xf32> to vector<18x128xf32>
    %134 = arith.addf %132, %133 : vector<18x128xf32>
    %135 = vector.extract_strided_slice %130 {offsets = [1, 256], sizes = [17, 128], strides = [1, 1]} : vector<18x384xf32> to vector<17x128xf32>
    %136 = tpu.concatenate %135, %0 in 0 : vector<17x128xf32>, vector<1x128xf32> -> vector<18x128xf32>
    %137 = arith.addf %134, %136 : vector<18x128xf32>
    %138 = vector.broadcast %113 : vector<1x128xf32> to vector<18x128xf32>
    %139 = arith.addf %137, %138 : vector<18x128xf32>
    %cst_40 = arith.constant 0.000000e+00 : f32
    %140 = vector.broadcast %cst_40 : f32 to vector<18x128xf32>
    %141 = arith.maximumf %139, %140 : vector<18x128xf32>
    %cst_41 = arith.constant 0.000000e+00 : f32
    %142 = vector.shape_cast %25 : vector<18x1xi1> to vector<18x1xi1>
    %143 = vector.broadcast %142 : vector<18x1xi1> to vector<18x128xi1>
    %144 = vector.broadcast %cst_41 : f32 to vector<18x128xf32>
    %145 = arith.select %143, %141, %144 : vector<18x128xi1>, vector<18x128xf32>
    %c2_i32_42 = arith.constant 2 : i32
    %cst_43 = arith.constant dense<0.000000e+00> : vector<18x384xf32>
    %146 = tpu.matmul %145, %111, %cst_43 {dimension_numbers = #tpu.dot_dimension_numbers<[1], [0], [0], [1], [0, 0, 1, 1], [], []>} : vector<18x128xf32>, vector<128x384xf32>, vector<18x384xf32> -> vector<18x384xf32>
    %147 = vector.extract_strided_slice %146 {offsets = [0, 0], sizes = [17, 128], strides = [1, 1]} : vector<18x384xf32> to vector<17x128xf32>
    %148 = tpu.concatenate %0, %147 in 0 : vector<1x128xf32>, vector<17x128xf32> -> vector<18x128xf32>
    %149 = vector.extract_strided_slice %146 {offsets = [0, 128], sizes = [18, 128], strides = [1, 1]} : vector<18x384xf32> to vector<18x128xf32>
    %150 = arith.addf %148, %149 : vector<18x128xf32>
    %151 = vector.extract_strided_slice %146 {offsets = [1, 256], sizes = [17, 128], strides = [1, 1]} : vector<18x384xf32> to vector<17x128xf32>
    %152 = tpu.concatenate %151, %0 in 0 : vector<17x128xf32>, vector<1x128xf32> -> vector<18x128xf32>
    %153 = arith.addf %150, %152 : vector<18x128xf32>
    %154 = vector.broadcast %113 : vector<1x128xf32> to vector<18x128xf32>
    %155 = arith.addf %153, %154 : vector<18x128xf32>
    %cst_44 = arith.constant 0.000000e+00 : f32
    %156 = vector.broadcast %cst_44 : f32 to vector<18x128xf32>
    %157 = arith.maximumf %155, %156 : vector<18x128xf32>
    %cst_45 = arith.constant 0.000000e+00 : f32
    %158 = vector.shape_cast %25 : vector<18x1xi1> to vector<18x1xi1>
    %159 = vector.broadcast %158 : vector<18x1xi1> to vector<18x128xi1>
    %160 = vector.broadcast %cst_45 : f32 to vector<18x128xf32>
    %161 = arith.select %159, %157, %160 : vector<18x128xi1>, vector<18x128xf32>
    %c3_i32_46 = arith.constant 3 : i32
    %cst_47 = arith.constant dense<0.000000e+00> : vector<18x384xf32>
    %162 = tpu.matmul %161, %111, %cst_47 {dimension_numbers = #tpu.dot_dimension_numbers<[1], [0], [0], [1], [0, 0, 1, 1], [], []>} : vector<18x128xf32>, vector<128x384xf32>, vector<18x384xf32> -> vector<18x384xf32>
    %163 = vector.extract_strided_slice %162 {offsets = [0, 0], sizes = [17, 128], strides = [1, 1]} : vector<18x384xf32> to vector<17x128xf32>
    %164 = tpu.concatenate %0, %163 in 0 : vector<1x128xf32>, vector<17x128xf32> -> vector<18x128xf32>
    %165 = vector.extract_strided_slice %162 {offsets = [0, 128], sizes = [18, 128], strides = [1, 1]} : vector<18x384xf32> to vector<18x128xf32>
    %166 = arith.addf %164, %165 : vector<18x128xf32>
    %167 = vector.extract_strided_slice %162 {offsets = [1, 256], sizes = [17, 128], strides = [1, 1]} : vector<18x384xf32> to vector<17x128xf32>
    %168 = tpu.concatenate %167, %0 in 0 : vector<17x128xf32>, vector<1x128xf32> -> vector<18x128xf32>
    %169 = arith.addf %166, %168 : vector<18x128xf32>
    %170 = vector.broadcast %113 : vector<1x128xf32> to vector<18x128xf32>
    %171 = arith.addf %169, %170 : vector<18x128xf32>
    %cst_48 = arith.constant 0.000000e+00 : f32
    %172 = vector.broadcast %cst_48 : f32 to vector<18x128xf32>
    %173 = arith.maximumf %171, %172 : vector<18x128xf32>
    %cst_49 = arith.constant 0.000000e+00 : f32
    %174 = vector.shape_cast %25 : vector<18x1xi1> to vector<18x1xi1>
    %175 = vector.broadcast %174 : vector<18x1xi1> to vector<18x128xi1>
    %176 = vector.broadcast %cst_49 : f32 to vector<18x128xf32>
    %177 = arith.select %175, %173, %176 : vector<18x128xi1>, vector<18x128xf32>
    %c4_i32_50 = arith.constant 4 : i32
    %cst_51 = arith.constant dense<0.000000e+00> : vector<18x384xf32>
    %178 = tpu.matmul %177, %111, %cst_51 {dimension_numbers = #tpu.dot_dimension_numbers<[1], [0], [0], [1], [0, 0, 1, 1], [], []>} : vector<18x128xf32>, vector<128x384xf32>, vector<18x384xf32> -> vector<18x384xf32>
    %179 = vector.extract_strided_slice %178 {offsets = [0, 0], sizes = [17, 128], strides = [1, 1]} : vector<18x384xf32> to vector<17x128xf32>
    %180 = tpu.concatenate %0, %179 in 0 : vector<1x128xf32>, vector<17x128xf32> -> vector<18x128xf32>
    %181 = vector.extract_strided_slice %178 {offsets = [0, 128], sizes = [18, 128], strides = [1, 1]} : vector<18x384xf32> to vector<18x128xf32>
    %182 = arith.addf %180, %181 : vector<18x128xf32>
    %183 = vector.extract_strided_slice %178 {offsets = [1, 256], sizes = [17, 128], strides = [1, 1]} : vector<18x384xf32> to vector<17x128xf32>
    %184 = tpu.concatenate %183, %0 in 0 : vector<17x128xf32>, vector<1x128xf32> -> vector<18x128xf32>
    %185 = arith.addf %182, %184 : vector<18x128xf32>
    %186 = vector.broadcast %113 : vector<1x128xf32> to vector<18x128xf32>
    %187 = arith.addf %185, %186 : vector<18x128xf32>
    %cst_52 = arith.constant 0.000000e+00 : f32
    %188 = vector.broadcast %cst_52 : f32 to vector<18x128xf32>
    %189 = arith.maximumf %187, %188 : vector<18x128xf32>
    %cst_53 = arith.constant 0.000000e+00 : f32
    %190 = vector.shape_cast %25 : vector<18x1xi1> to vector<18x1xi1>
    %191 = vector.broadcast %190 : vector<18x1xi1> to vector<18x128xi1>
    %192 = vector.broadcast %cst_53 : f32 to vector<18x128xf32>
    %193 = arith.select %191, %189, %192 : vector<18x128xi1>, vector<18x128xf32>
    %194 = vector.extract_strided_slice %193 {offsets = [1, 0], sizes = [16, 128], strides = [1, 1]} : vector<18x128xf32> to vector<16x128xf32>
    %c0_54 = arith.constant 0 : index
    %c0_55 = arith.constant 0 : index
    %c0_56 = arith.constant 0 : index
    %195 = vector.load %arg4[%c0_54, %c0_55, %c0_56] : memref<1x16x128xf32, #tpu.memory_space<vmem>>, vector<1x16x128xf32>
    %196 = vector.shape_cast %195 : vector<1x16x128xf32> to vector<16x128xf32>
    %197 = vector.shape_cast %194 : vector<16x128xf32> to vector<1x16x128xf32>
    tpu.vector_store %arg4[%c0_54, %c0_55, %c0_56], %197 {strides = array<i32>} : memref<1x16x128xf32, #tpu.memory_space<vmem>>, vector<1x16x128xf32>,
    return
  }
  func.func @transform_0(%arg0: i32) -> (i32, i32, i32) {
    %c0_i32 = arith.constant 0 : i32
    %c0_i32_0 = arith.constant 0 : i32
    %c0_i32_1 = arith.constant 0 : i32
    return %arg0, %c0_i32, %c0_i32_0 : i32, i32, i32
  }
  func.func @transform_1(%arg0: i32) -> (i32, i32, i32) {
    %c0_i32 = arith.constant 0 : i32
    %c0_i32_0 = arith.constant 0 : i32
    %c0_i32_1 = arith.constant 0 : i32
    %c0_i32_2 = arith.constant 0 : i32
    return %c0_i32, %c0_i32_0, %c0_i32_1 : i32, i32, i32
  }
  func.func @transform_2(%arg0: i32) -> (i32, i32, i32) {
    %c0_i32 = arith.constant 0 : i32
    %c0_i32_0 = arith.constant 0 : i32
    %c0_i32_1 = arith.constant 0 : i32
    %c0_i32_2 = arith.constant 0 : i32
    return %c0_i32, %c0_i32_0, %c0_i32_1 : i32, i32, i32
  }
  func.func @transform_3(%arg0: i32) -> (i32, i32, i32) {
    %c0_i32 = arith.constant 0 : i32
    %c0_i32_0 = arith.constant 0 : i32
    %c0_i32_1 = arith.constant 0 : i32
    return %arg0, %c0_i32, %c0_i32_0 : i32, i32, i32
  }
}

</mosaic_0001>

<llo_original>
// kernel: hierarchical_ddn_forward.1
$region0: #{hierarchical_ddn_forward.1}
  #allocation0 [shape = 'u32[]', space=smem, size = 0x4, offset = 0x4, fixed_abs, tag = 'smem constant byte address 0x4 - core index']
  #allocation1 [shape = 'u32[144,128]{1,0:T(1,128)}', space=vmem, size = 0x12000, scoped, tag = 'internal scratch']
  %s0 = inlined_call_operand.vmem [shape: f32[1,16,128], index: 0, kind: input, shape index: {}]
  %s1 = inlined_call_operand.hbm [shape: f32[2,128,384], index: 1, kind: input, shape index: {}]
  %s2 = inlined_call_operand.vmem [shape: f32[2,1,128], index: 2, kind: input, shape index: {}]
  %s3 = inlined_call_operand.vmem [shape: f32[1,16,128], index: 3, kind: output, shape index: {}]
  %s4 = sld [smem:[#allocation0]]
  $region26: #{hierarchical_ddn_forward.1} parent=0
    _
  %s6 = ssub.s32 1, %s4
  %s7 = scalar_select 0, %s6, %s4
  $region1: #{hierarchical_ddn_forward.1} parent=0
    #allocation2 [shape = 'u8[393216]{0}', space=vmem, size = 0x60000, scoped, tag = 'input window, operand 1, single buffered']
    #allocation3 [shape = 's32[1]{0}', space=sflag, size = 0x4, scoped, tag = 'scoped memory for hierarchical_ddn_forward.1']
    %8 = vsyncpa [#allocation3], 0
    // Predicated region
    $region2: #{hierarchical_ddn_forward.1} parent=1 // pred_check
      _
    $region3: #{hierarchical_ddn_forward.1} parent=1 // pred_check_branch
      %10 = sbr.rel (0) target = $region5
    $region4: #{hierarchical_ddn_forward.1} parent=1 // pred_region
      _
    $region5: #{hierarchical_ddn_forward.1} parent=1 // pred_fallthru
      _
    // Predicated region
    $region6: #{hierarchical_ddn_forward.1} parent=1 // pred_check
      _
    $region7: #{hierarchical_ddn_forward.1} parent=1 // pred_check_branch
      %12 = sbr.rel (0) target = $region9
    $region8: #{hierarchical_ddn_forward.1} parent=1 // pred_region
      %s14 = ssub.s32 12288, 12288
      %15 = vsyncadd [#allocation3], %s14
      %s16 = sshll.u32 [#allocation2], 4
      %s17 = int_to_ptr.vmem [resolvable:$true] %s16
      %22 = dma.hbm_to_vmem [thread:$0]  %s1, 12288, %s17, [#allocation3], 384, 384, 24
    $region9: #{hierarchical_ddn_forward.1} parent=1 // pred_fallthru
      _
    // Predicated region
    $region10: #{hierarchical_ddn_forward.1} parent=1 // pred_check
      _
    $region11: #{hierarchical_ddn_forward.1} parent=1 // pred_check_branch
      %24 = sbr.rel (0) target = $region13
    $region12: #{hierarchical_ddn_forward.1} parent=1 // pred_region
      _
    $region13: #{hierarchical_ddn_forward.1} parent=1 // pred_fallthru
      _
    // Predicated region
    $region14: #{hierarchical_ddn_forward.1} parent=1 // pred_check
      _
    $region15: #{hierarchical_ddn_forward.1} parent=1 // pred_check_branch
      %26 = sbr.rel (0) target = $region17
    $region16: #{hierarchical_ddn_forward.1} parent=1 // pred_region
      %27 = dma.done [#allocation3], 12288
    $region17: #{hierarchical_ddn_forward.1} parent=1 // pred_fallthru
      _
    %v28 = vld [vmem:[%s0] sm:$0xff]
    %v29 = vld [vmem:[%s0 + $0x8] sm:$0xff]
    %vm32 = vcmask 1040384
    %v33 = vrot.slane %v28, 7
    %v34 = vrot.slane %v29, 7
    %v35 = vsel %vm32, %v33, %v34
    %v39 = vsel %vm32, 0.0, %v33
    %v40 = vsel %vm32, %v34, 0.0
    %v41 = vlaneseq
    %v42 = vshrl.u32 %v41, 7
    %v43 = vadd.s32 %v42, 8
    %v44 = vadd.s32 %v42, 16
    %vm45 = vcmp.lt.s32.totalorder %v42, 0
    %v46 = vsub.s32 0, %v42
    %v47 = vsel %vm45, %v46, %v42
    %v48 = vmul.u32.u64.compose %v47, 3817748708
    %v49 = vextract.low.u32 %v48
    %v50 = vextract.high.u32 %v48
    %v51 = vshrl.u32 %v50, 4
    %v52 = vmul.u32 %v51, 18
    %v53 = vsub.s32 %v47, %v52
    %v54 = vsub.s32 0, %v53
    %v55 = vsel %vm45, %v54, %v53
    %vm56 = vcmp.lt.s32.totalorder %v43, 0
    %v57 = vsub.s32 0, %v43
    %v58 = vsel %vm56, %v57, %v43
    %v59 = vmul.u32.u64.compose %v58, 3817748708
    %v60 = vextract.low.u32 %v59
    %v61 = vextract.high.u32 %v59
    %v62 = vshrl.u32 %v61, 4
    %v63 = vmul.u32 %v62, 18
    %v64 = vsub.s32 %v58, %v63
    %v65 = vsub.s32 0, %v64
    %v66 = vsel %vm56, %v65, %v64
    %vm67 = vcmp.lt.s32.totalorder %v44, 0
    %v68 = vsub.s32 0, %v44
    %v69 = vsel %vm67, %v68, %v44
    %v70 = vmul.u32.u64.compose %v69, 3817748708
    %v71 = vextract.low.u32 %v70
    %v72 = vextract.high.u32 %v70
    %v73 = vshrl.u32 %v72, 4
    %v74 = vmul.u32 %v73, 18
    %v75 = vsub.s32 %v69, %v74
    %v76 = vsub.s32 0, %v75
    %v77 = vsel %vm67, %v76, %v75
    %vm78 = vcmp.ne.s32.totalorder %v55, 0
    %vm79 = vcmp.ne.s32.totalorder %v66, 0
    %vm80 = vcmp.ne.s32.totalorder %v77, 0
    %vm81 = vcmp.lt.s32.totalorder %v55, 0
    %vm82 = vcmp.lt.s32.totalorder %v66, 0
    %vm83 = vcmp.lt.s32.totalorder %v77, 0
    %vm84 = vmand %vm81, %vm78
    %vm85 = vmand %vm82, %vm79
    %vm86 = vmand %vm83, %vm80
    %v87 = vadd.s32 %v55, 18
    %v88 = vadd.s32 %v66, 18
    %v89 = vadd.s32 %v77, 18
    %v90 = vsel %vm84, %v87, %v55
    %v91 = vsel %vm85, %v88, %v66
    %v92 = vsel %vm86, %v89, %v77
    %vm93 = vcmp.ne.s32.totalorder %v90, 0
    %vm94 = vcmp.ne.s32.totalorder %v91, 0
    %vm95 = vcmp.ne.s32.totalorder %v92, 0
    %vm96 = vcmp.ne.s32.totalorder %v90, 17
    %vm97 = vcmp.ne.s32.totalorder %v91, 17
    %vm98 = vcmp.ne.s32.totalorder %v92, 17
    %vm99 = vmand %vm93, %vm96
    %vm100 = vmand %vm94, %vm97
    %vm101 = vmand %vm95, %vm98
    %v102 = vld [vmem:[#allocation2] sm:$0xff]
    %v103 = vld [vmem:[#allocation2 + $0x8] sm:$0xff]
    %v104 = vld [vmem:[#allocation2 + $0x10] sm:$0xff]
    %v105 = vld [vmem:[#allocation2 + $0x18] sm:$0xff]
    %v106 = vld [vmem:[#allocation2 + $0x20] sm:$0xff]
    %v107 = vld [vmem:[#allocation2 + $0x28] sm:$0xff]
    %v108 = vld [vmem:[#allocation2 + $0x30] sm:$0xff]
    %v109 = vld [vmem:[#allocation2 + $0x38] sm:$0xff]
    %v110 = vld [vmem:[#allocation2 + $0x40] sm:$0xff]
    %v111 = vld [vmem:[#allocation2 + $0x48] sm:$0xff]
    %v112 = vld [vmem:[#allocation2 + $0x50] sm:$0xff]
    %v113 = vld [vmem:[#allocation2 + $0x58] sm:$0xff]
    %v114 = vld [vmem:[#allocation2 + $0x60] sm:$0xff]
    %v115 = vld [vmem:[#allocation2 + $0x68] sm:$0xff]
    %v116 = vld [vmem:[#allocation2 + $0x70] sm:$0xff]
    %v117 = vld [vmem:[#allocation2 + $0x78] sm:$0xff]
    %v118 = vld [vmem:[#allocation2 + $0x80] sm:$0xff]
    %v119 = vld [vmem:[#allocation2 + $0x88] sm:$0xff]
    %v120 = vld [vmem:[#allocation2 + $0x90] sm:$0xff]
    %v121 = vld [vmem:[#allocation2 + $0x98] sm:$0xff]
    %v122 = vld [vmem:[#allocation2 + $0xa0] sm:$0xff]
    %v123 = vld [vmem:[#allocation2 + $0xa8] sm:$0xff]
    %v124 = vld [vmem:[#allocation2 + $0xb0] sm:$0xff]
    %v125 = vld [vmem:[#allocation2 + $0xb8] sm:$0xff]
    %v126 = vld [vmem:[#allocation2 + $0xc0] sm:$0xff]
    %v127 = vld [vmem:[#allocation2 + $0xc8] sm:$0xff]
    %v128 = vld [vmem:[#allocation2 + $0xd0] sm:$0xff]
    %v129 = vld [vmem:[#allocation2 + $0xd8] sm:$0xff]
    %v130 = vld [vmem:[#allocation2 + $0xe0] sm:$0xff]
    %v131 = vld [vmem:[#allocation2 + $0xe8] sm:$0xff]
    %v132 = vld [vmem:[#allocation2 + $0xf0] sm:$0xff]
    %v133 = vld [vmem:[#allocation2 + $0xf8] sm:$0xff]
    %v134 = vld [vmem:[#allocation2 + $0x100] sm:$0xff]
    %v135 = vld [vmem:[#allocation2 + $0x108] sm:$0xff]
    %v136 = vld [vmem:[#allocation2 + $0x110] sm:$0xff]
    %v137 = vld [vmem:[#allocation2 + $0x118] sm:$0xff]
    %v138 = vld [vmem:[#allocation2 + $0x120] sm:$0xff]
    %v139 = vld [vmem:[#allocation2 + $0x128] sm:$0xff]
    %v140 = vld [vmem:[#allocation2 + $0x130] sm:$0xff]
    %v141 = vld [vmem:[#allocation2 + $0x138] sm:$0xff]
    %v142 = vld [vmem:[#allocation2 + $0x140] sm:$0xff]
    %v143 = vld [vmem:[#allocation2 + $0x148] sm:$0xff]
    %v144 = vld [vmem:[#allocation2 + $0x150] sm:$0xff]
    %v145 = vld [vmem:[#allocation2 + $0x158] sm:$0xff]
    %v146 = vld [vmem:[#allocation2 + $0x160] sm:$0xff]
    %v147 = vld [vmem:[#allocation2 + $0x168] sm:$0xff]
    %v148 = vld [vmem:[#allocation2 + $0x170] sm:$0xff]
    %v149 = vld [vmem:[#allocation2 + $0x178] sm:$0xff]
    %v150 = vld [vmem:[%s2] sm:$0x1]
    %151 = vmatprep.subr.mxu0 %v103
    %152 = vmatpush1.msra.mxu0 %v102
    %153 = vmatprep.subr.mxu0 %v106
    %154 = vmatpush1.msra.mxu0 %v105
    %155 = vmatprep.subr.mxu0 %v109
    %156 = vmatpush1.msra.mxu0 %v108
    %157 = vmatprep.subr.mxu0 %v112
    %158 = vmatpush1.msra.mxu0 %v111
    %159 = vmatprep.subr.mxu0 %v115
    %160 = vmatpush1.msra.mxu0 %v114
    %161 = vmatprep.subr.mxu0 %v118
    %162 = vmatpush1.msra.mxu0 %v117
    %163 = vmatprep.subr.mxu0 %v121
    %164 = vmatpush1.msra.mxu0 %v120
    %165 = vmatprep.subr.mxu0 %v124
    %166 = vmatpush1.msra.mxu0 %v123
    %167 = vmatprep.subr.mxu0 %v127
    %168 = vmatpush1.msra.mxu0 %v126
    %169 = vmatprep.subr.mxu0 %v130
    %170 = vmatpush1.msra.mxu0 %v129
    %171 = vmatprep.subr.mxu0 %v133
    %172 = vmatpush1.msra.mxu0 %v132
    %173 = vmatprep.subr.mxu0 %v136
    %174 = vmatpush1.msra.mxu0 %v135
    %175 = vmatprep.subr.mxu0 %v139
    %176 = vmatpush1.msra.mxu0 %v138
    %177 = vmatprep.subr.mxu0 %v142
    %178 = vmatpush1.msra.mxu0 %v141
    %179 = vmatprep.subr.mxu0 %v145
    %180 = vmatpush1.msra.mxu0 %v144
    %181 = vmatprep.subr.mxu0 %v148
    %182 = vmatpush1.msra.mxu0 %v147
    %183 = vmatprep.subr.mxu0 0.0
    %184 = vmatpush1.msra.mxu0 0.0
    %185 = vmatprep.subr.mxu0 0.0
    %186 = vmatpush1.msra.mxu0 0.0
    %187 = vmatprep.subr.mxu0 0.0
    %188 = vmatpush1.msra.mxu0 0.0
    %189 = vmatprep.subr.mxu0 0.0
    %190 = vmatpush1.msra.mxu0 0.0
    %191 = vmatprep.subr.mxu0 0.0
    %192 = vmatpush1.msra.mxu0 0.0
    %193 = vmatprep.subr.mxu0 0.0
    %194 = vmatpush1.msra.mxu0 0.0
    %195 = vmatprep.subr.mxu0 0.0
    %196 = vmatpush1.msra.mxu0 0.0
    %197 = vmatprep.subr.mxu0 0.0
    %198 = vmatpush1.msra.mxu0 0.0
    %199 = vmatprep.subr.mxu0 0.0
    %200 = vmatpush1.msra.mxu0 0.0
    %201 = vmatprep.subr.mxu0 0.0
    %202 = vmatpush1.msra.mxu0 0.0
    %203 = vmatprep.subr.mxu0 0.0
    %204 = vmatpush1.msra.mxu0 0.0
    %205 = vmatprep.subr.mxu0 0.0
    %206 = vmatpush1.msra.mxu0 0.0
    %207 = vmatprep.subr.mxu0 0.0
    %208 = vmatpush1.msra.mxu0 0.0
    %209 = vmatprep.subr.mxu0 0.0
    %210 = vmatpush1.msra.mxu0 0.0
    %211 = vmatprep.subr.mxu0 0.0
    %212 = vmatpush1.msra.mxu0 0.0
    %213 = vmatprep.subr.mxu0 0.0
    %214 = vmatpush1.msra.mxu0 0.0
    %215 = vmatprep.mubr.f32.mxu0 0.0
    %216 = vmatmul.mubr.f32.gmra.mrb[0].mxu0 %v39
    %v217 = vpop.f32.mrb[0].mxu0
    %v218 = vadd.f32 0.0, %v217
    %v219 = vpop.f32.mrb[0].mxu0
    %v220 = vadd.f32 0.0, %v219
    %221 = vmatprep.mubr.f32.mxu0 0.0
    %222 = vmatmul.mubr.f32.gmra.mrb[0].mxu0 %v35
    %v223 = vpop.f32.mrb[0].mxu0
    %v224 = vadd.f32 0.0, %v223
    %v225 = vpop.f32.mrb[0].mxu0
    %v226 = vadd.f32 0.0, %v225
    %227 = vmatprep.mubr.f32.mxu0 0.0
    %228 = vmatmul.mubr.f32.gmra.mrb[0].mxu0 %v40
    %v229 = vpop.f32.mrb[0].mxu0
    %v230 = vadd.f32 0.0, %v229
    %v231 = vpop.f32.mrb[0].mxu0
    %v232 = vadd.f32 0.0, %v231
    %233 = vdwg.mxu0
    %234 = vmatprep.subr.mxu0 0.0
    %235 = vmatpush1.msra.mxu0 %v104
    %236 = vmatprep.subr.mxu0 0.0
    %237 = vmatpush1.msra.mxu0 %v107
    %238 = vmatprep.subr.mxu0 0.0
    %239 = vmatpush1.msra.mxu0 %v110
    %240 = vmatprep.subr.mxu0 0.0
    %241 = vmatpush1.msra.mxu0 %v113
    %242 = vmatprep.subr.mxu0 0.0
    %243 = vmatpush1.msra.mxu0 %v116
    %244 = vmatprep.subr.mxu0 0.0
    %245 = vmatpush1.msra.mxu0 %v119
    %246 = vmatprep.subr.mxu0 0.0
    %247 = vmatpush1.msra.mxu0 %v122
    %248 = vmatprep.subr.mxu0 0.0
    %249 = vmatpush1.msra.mxu0 %v125
    %250 = vmatprep.subr.mxu0 0.0
    %251 = vmatpush1.msra.mxu0 %v128
    %252 = vmatprep.subr.mxu0 0.0
    %253 = vmatpush1.msra.mxu0 %v131
    %254 = vmatprep.subr.mxu0 0.0
    %255 = vmatpush1.msra.mxu0 %v134
    %256 = vmatprep.subr.mxu0 0.0
    %257 = vmatpush1.msra.mxu0 %v137
    %258 = vmatprep.subr.mxu0 0.0
    %259 = vmatpush1.msra.mxu0 %v140
    %260 = vmatprep.subr.mxu0 0.0
    %261 = vmatpush1.msra.mxu0 %v143
    %262 = vmatprep.subr.mxu0 0.0
    %263 = vmatpush1.msra.mxu0 %v146
    %264 = vmatprep.subr.mxu0 0.0
    %265 = vmatpush1.msra.mxu0 %v149
    %266 = vmatprep.subr.mxu0 0.0
    %267 = vmatpush1.msra.mxu0 0.0
    %268 = vmatprep.subr.mxu0 0.0
    %269 = vmatpush1.msra.mxu0 0.0
    %270 = vmatprep.subr.mxu0 0.0
    %271 = vmatpush1.msra.mxu0 0.0
    %272 = vmatprep.subr.mxu0 0.0
    %273 = vmatpush1.msra.mxu0 0.0
    %274 = vmatprep.subr.mxu0 0.0
    %275 = vmatpush1.msra.mxu0 0.0
    %276 = vmatprep.subr.mxu0 0.0
    %277 = vmatpush1.msra.mxu0 0.0
    %278 = vmatprep.subr.mxu0 0.0
    %279 = vmatpush1.msra.mxu0 0.0
    %280 = vmatprep.subr.mxu0 0.0
    %281 = vmatpush1.msra.mxu0 0.0
    %282 = vmatprep.subr.mxu0 0.0
    %283 = vmatpush1.msra.mxu0 0.0
    %284 = vmatprep.subr.mxu0 0.0
    %285 = vmatpush1.msra.mxu0 0.0
    %286 = vmatprep.subr.mxu0 0.0
    %287 = vmatpush1.msra.mxu0 0.0
    %288 = vmatprep.subr.mxu0 0.0
    %289 = vmatpush1.msra.mxu0 0.0
    %290 = vmatprep.subr.mxu0 0.0
    %291 = vmatpush1.msra.mxu0 0.0
    %292 = vmatprep.subr.mxu0 0.0
    %293 = vmatpush1.msra.mxu0 0.0
    %294 = vmatprep.subr.mxu0 0.0
    %295 = vmatpush1.msra.mxu0 0.0
    %296 = vmatprep.subr.mxu0 0.0
    %297 = vmatpush1.msra.mxu0 0.0
    %298 = vmatprep.mubr.f32.mxu0 0.0
    %299 = vmatmul.mubr.f32.gmra.mrb[0].mxu0 %v39
    %v300 = vpop.f32.mrb[0].mxu0
    %v301 = vadd.f32 0.0, %v300
    %v302 = vpop.f32.mrb[0].mxu0
    %303 = vmatprep.mubr.f32.mxu0 0.0
    %304 = vmatmul.mubr.f32.gmra.mrb[0].mxu0 %v35
    %v305 = vpop.f32.mrb[0].mxu0
    %v306 = vadd.f32 0.0, %v305
    %v307 = vpop.f32.mrb[0].mxu0
    %308 = vmatprep.mubr.f32.mxu0 0.0
    %309 = vmatmul.mubr.f32.gmra.mrb[0].mxu0 %v40
    %v310 = vpop.f32.mrb[0].mxu0
    %v311 = vadd.f32 0.0, %v310
    %v312 = vpop.f32.mrb[0].mxu0
    %313 = vdwg.mxu0
    %v317 = vrot.slane %v218, 7
    %v318 = vrot.slane %v224, 7
    %v319 = vsel %vm32, %v317, %v318
    %v320 = vrot.slane %v230, 7
    %v321 = vsel %vm32, %v318, %v320
    %v325 = vsel %vm32, 0.0, %v317
    %v326 = vadd.f32 %v325, %v220
    %v327 = vadd.f32 %v319, %v226
    %v328 = vadd.f32 %v321, %v232
    %vm332 = vcmask 1046528
    %v333 = vrot.slane %v301, 1
    %v334 = vrot.slane %v306, 1
    %v335 = vsel %vm332, %v333, %v334
    %v336 = vrot.slane %v311, 1
    %v337 = vsel %vm332, %v334, %v336
    %v341 = vsel %vm32, %v336, 0.0
    %v342 = vadd.f32 %v326, %v335
    %v343 = vadd.f32 %v327, %v337
    %v344 = vadd.f32 %v328, %v341
    %v346 = vlaneseq
    %v347 = vshrl.u32 %v346, 7
    %v348 = vsub.s32 0, %v347
    %v349 = vrot.slane %v150, %v348
    %v351 = vadd.f32 %v342, %v349
    %v352 = vadd.f32 %v343, %v349
    %v353 = vadd.f32 %v344, %v349
    %v354 = vmax.f32 %v351, 0.0
    %v355 = vmax.f32 %v352, 0.0
    %v356 = vmax.f32 %v353, 0.0
    %v357 = vsel %vm99, 1, 0
    %v358 = vsel %vm100, 1, 0
    %v359 = vsel %vm101, 1, 0
    %vm360 = vcmp.eq.s32.totalorder %v357, 1
    %vm361 = vcmp.eq.s32.totalorder %v358, 1
    %vm362 = vcmp.eq.s32.totalorder %v359, 1
    %v363 = vsel %vm360, %v354, 0.0
    %v364 = vsel %vm361, %v355, 0.0
    %v365 = vsel %vm362, %v356, 0.0
    %366 = vmatprep.subr.mxu0 %v103
    %367 = vmatpush1.msra.mxu0 %v102
    %368 = vmatprep.subr.mxu0 %v106
    %369 = vmatpush1.msra.mxu0 %v105
    %370 = vmatprep.subr.mxu0 %v109
    %371 = vmatpush1.msra.mxu0 %v108
    %372 = vmatprep.subr.mxu0 %v112
    %373 = vmatpush1.msra.mxu0 %v111
    %374 = vmatprep.subr.mxu0 %v115
    %375 = vmatpush1.msra.mxu0 %v114
    %376 = vmatprep.subr.mxu0 %v118
    %377 = vmatpush1.msra.mxu0 %v117
    %378 = vmatprep.subr.mxu0 %v121
    %379 = vmatpush1.msra.mxu0 %v120
    %380 = vmatprep.subr.mxu0 %v124
    %381 = vmatpush1.msra.mxu0 %v123
    %382 = vmatprep.subr.mxu0 %v127
    %383 = vmatpush1.msra.mxu0 %v126
    %384 = vmatprep.subr.mxu0 %v130
    %385 = vmatpush1.msra.mxu0 %v129
    %386 = vmatprep.subr.mxu0 %v133
    %387 = vmatpush1.msra.mxu0 %v132
    %388 = vmatprep.subr.mxu0 %v136
    %389 = vmatpush1.msra.mxu0 %v135
    %390 = vmatprep.subr.mxu0 %v139
    %391 = vmatpush1.msra.mxu0 %v138
    %392 = vmatprep.subr.mxu0 %v142
    %393 = vmatpush1.msra.mxu0 %v141
    %394 = vmatprep.subr.mxu0 %v145
    %395 = vmatpush1.msra.mxu0 %v144
    %396 = vmatprep.subr.mxu0 %v148
    %397 = vmatpush1.msra.mxu0 %v147
    %398 = vmatprep.subr.mxu0 0.0
    %399 = vmatpush1.msra.mxu0 0.0
    %400 = vmatprep.subr.mxu0 0.0
    %401 = vmatpush1.msra.mxu0 0.0
    %402 = vmatprep.subr.mxu0 0.0
    %403 = vmatpush1.msra.mxu0 0.0
    %404 = vmatprep.subr.mxu0 0.0
    %405 = vmatpush1.msra.mxu0 0.0
    %406 = vmatprep.subr.mxu0 0.0
    %407 = vmatpush1.msra.mxu0 0.0
    %408 = vmatprep.subr.mxu0 0.0
    %409 = vmatpush1.msra.mxu0 0.0
    %410 = vmatprep.subr.mxu0 0.0
    %411 = vmatpush1.msra.mxu0 0.0
    %412 = vmatprep.subr.mxu0 0.0
    %413 = vmatpush1.msra.mxu0 0.0
    %414 = vmatprep.subr.mxu0 0.0
    %415 = vmatpush1.msra.mxu0 0.0
    %416 = vmatprep.subr.mxu0 0.0
    %417 = vmatpush1.msra.mxu0 0.0
    %418 = vmatprep.subr.mxu0 0.0
    %419 = vmatpush1.msra.mxu0 0.0
    %420 = vmatprep.subr.mxu0 0.0
    %421 = vmatpush1.msra.mxu0 0.0
    %422 = vmatprep.subr.mxu0 0.0
    %423 = vmatpush1.msra.mxu0 0.0
    %424 = vmatprep.subr.mxu0 0.0
    %425 = vmatpush1.msra.mxu0 0.0
    %426 = vmatprep.subr.mxu0 0.0
    %427 = vmatpush1.msra.mxu0 0.0
    %428 = vmatprep.subr.mxu0 0.0
    %429 = vmatpush1.msra.mxu0 0.0
    %430 = vmatprep.mubr.f32.mxu0 0.0
    %431 = vmatmul.mubr.f32.gmra.mrb[0].mxu0 %v363
    %v432 = vpop.f32.mrb[0].mxu0
    %v433 = vadd.f32 0.0, %v432
    %v434 = vpop.f32.mrb[0].mxu0
    %v435 = vadd.f32 0.0, %v434
    %436 = vmatprep.mubr.f32.mxu0 0.0
    %437 = vmatmul.mubr.f32.gmra.mrb[0].mxu0 %v364
    %v438 = vpop.f32.mrb[0].mxu0
    %v439 = vadd.f32 0.0, %v438
    %v440 = vpop.f32.mrb[0].mxu0
    %v441 = vadd.f32 0.0, %v440
    %442 = vmatprep.mubr.f32.mxu0 0.0
    %443 = vmatmul.mubr.f32.gmra.mrb[0].mxu0 %v365
    %v444 = vpop.f32.mrb[0].mxu0
    %v445 = vadd.f32 0.0, %v444
    %v446 = vpop.f32.mrb[0].mxu0
    %v447 = vadd.f32 0.0, %v446
    %448 = vdwg.mxu0
    %449 = vmatprep.subr.mxu0 0.0
    %450 = vmatpush1.msra.mxu0 %v104
    %451 = vmatprep.subr.mxu0 0.0
    %452 = vmatpush1.msra.mxu0 %v107
    %453 = vmatprep.subr.mxu0 0.0
    %454 = vmatpush1.msra.mxu0 %v110
    %455 = vmatprep.subr.mxu0 0.0
    %456 = vmatpush1.msra.mxu0 %v113
    %457 = vmatprep.subr.mxu0 0.0
    %458 = vmatpush1.msra.mxu0 %v116
    %459 = vmatprep.subr.mxu0 0.0
    %460 = vmatpush1.msra.mxu0 %v119
    %461 = vmatprep.subr.mxu0 0.0
    %462 = vmatpush1.msra.mxu0 %v122
    %463 = vmatprep.subr.mxu0 0.0
    %464 = vmatpush1.msra.mxu0 %v125
    %465 = vmatprep.subr.mxu0 0.0
    %466 = vmatpush1.msra.mxu0 %v128
    %467 = vmatprep.subr.mxu0 0.0
    %468 = vmatpush1.msra.mxu0 %v131
    %469 = vmatprep.subr.mxu0 0.0
    %470 = vmatpush1.msra.mxu0 %v134
    %471 = vmatprep.subr.mxu0 0.0
    %472 = vmatpush1.msra.mxu0 %v137
    %473 = vmatprep.subr.mxu0 0.0
    %474 = vmatpush1.msra.mxu0 %v140
    %475 = vmatprep.subr.mxu0 0.0
    %476 = vmatpush1.msra.mxu0 %v143
    %477 = vmatprep.subr.mxu0 0.0
    %478 = vmatpush1.msra.mxu0 %v146
    %479 = vmatprep.subr.mxu0 0.0
    %480 = vmatpush1.msra.mxu0 %v149
    %481 = vmatprep.subr.mxu0 0.0
    %482 = vmatpush1.msra.mxu0 0.0
    %483 = vmatprep.subr.mxu0 0.0
    %484 = vmatpush1.msra.mxu0 0.0
    %485 = vmatprep.subr.mxu0 0.0
    %486 = vmatpush1.msra.mxu0 0.0
    %487 = vmatprep.subr.mxu0 0.0
    %488 = vmatpush1.msra.mxu0 0.0
    %489 = vmatprep.subr.mxu0 0.0
    %490 = vmatpush1.msra.mxu0 0.0
    %491 = vmatprep.subr.mxu0 0.0
    %492 = vmatpush1.msra.mxu0 0.0
    %493 = vmatprep.subr.mxu0 0.0
    %494 = vmatpush1.msra.mxu0 0.0
    %495 = vmatprep.subr.mxu0 0.0
    %496 = vmatpush1.msra.mxu0 0.0
    %497 = vmatprep.subr.mxu0 0.0
    %498 = vmatpush1.msra.mxu0 0.0
    %499 = vmatprep.subr.mxu0 0.0
    %500 = vmatpush1.msra.mxu0 0.0
    %501 = vmatprep.subr.mxu0 0.0
    %502 = vmatpush1.msra.mxu0 0.0
    %503 = vmatprep.subr.mxu0 0.0
    %504 = vmatpush1.msra.mxu0 0.0
    %505 = vmatprep.subr.mxu0 0.0
    %506 = vmatpush1.msra.mxu0 0.0
    %507 = vmatprep.subr.mxu0 0.0
    %508 = vmatpush1.msra.mxu0 0.0
    %509 = vmatprep.subr.mxu0 0.0
    %510 = vmatpush1.msra.mxu0 0.0
    %511 = vmatprep.subr.mxu0 0.0
    %512 = vmatpush1.msra.mxu0 0.0
    %513 = vmatprep.mubr.f32.mxu0 0.0
    %514 = vmatmul.mubr.f32.gmra.mrb[0].mxu0 %v363
    %v515 = vpop.f32.mrb[0].mxu0
    %v516 = vadd.f32 0.0, %v515
    %v517 = vpop.f32.mrb[0].mxu0
    %518 = vmatprep.mubr.f32.mxu0 0.0
    %519 = vmatmul.mubr.f32.gmra.mrb[0].mxu0 %v364
    %v520 = vpop.f32.mrb[0].mxu0
    %v521 = vadd.f32 0.0, %v520
    %v522 = vpop.f32.mrb[0].mxu0
    %523 = vmatprep.mubr.f32.mxu0 0.0
    %524 = vmatmul.mubr.f32.gmra.mrb[0].mxu0 %v365
    %v525 = vpop.f32.mrb[0].mxu0
    %v526 = vadd.f32 0.0, %v525
    %v527 = vpop.f32.mrb[0].mxu0
    %528 = vdwg.mxu0
    %v532 = vrot.slane %v433, 7
    %v533 = vrot.slane %v439, 7
    %v534 = vsel %vm32, %v532, %v533
    %v535 = vrot.slane %v445, 7
    %v536 = vsel %vm32, %v533, %v535
    %v540 = vsel %vm32, 0.0, %v532
    %v541 = vadd.f32 %v540, %v435
    %v542 = vadd.f32 %v534, %v441
    %v543 = vadd.f32 %v536, %v447
    %v547 = vrot.slane %v516, 1
    %v548 = vrot.slane %v521, 1
    %v549 = vsel %vm332, %v547, %v548
    %v550 = vrot.slane %v526, 1
    %v551 = vsel %vm332, %v548, %v550
    %v555 = vsel %vm32, %v550, 0.0
    %v556 = vadd.f32 %v541, %v549
    %v557 = vadd.f32 %v542, %v551
    %v558 = vadd.f32 %v543, %v555
    %v559 = vadd.f32 %v556, %v349
    %v560 = vadd.f32 %v557, %v349
    %v561 = vadd.f32 %v558, %v349
    %v562 = vmax.f32 %v559, 0.0
    %v563 = vmax.f32 %v560, 0.0
    %v564 = vmax.f32 %v561, 0.0
    %v565 = vsel %vm360, %v562, 0.0
    %v566 = vsel %vm361, %v563, 0.0
    %v567 = vsel %vm362, %v564, 0.0
    %568 = vmatprep.subr.mxu0 %v103
    %569 = vmatpush1.msra.mxu0 %v102
    %570 = vmatprep.subr.mxu0 %v106
    %571 = vmatpush1.msra.mxu0 %v105
    %572 = vmatprep.subr.mxu0 %v109
    %573 = vmatpush1.msra.mxu0 %v108
    %574 = vmatprep.subr.mxu0 %v112
    %575 = vmatpush1.msra.mxu0 %v111
    %576 = vmatprep.subr.mxu0 %v115
    %577 = vmatpush1.msra.mxu0 %v114
    %578 = vmatprep.subr.mxu0 %v118
    %579 = vmatpush1.msra.mxu0 %v117
    %580 = vmatprep.subr.mxu0 %v121
    %581 = vmatpush1.msra.mxu0 %v120
    %582 = vmatprep.subr.mxu0 %v124
    %583 = vmatpush1.msra.mxu0 %v123
    %584 = vmatprep.subr.mxu0 %v127
    %585 = vmatpush1.msra.mxu0 %v126
    %586 = vmatprep.subr.mxu0 %v130
    %587 = vmatpush1.msra.mxu0 %v129
    %588 = vmatprep.subr.mxu0 %v133
    %589 = vmatpush1.msra.mxu0 %v132
    %590 = vmatprep.subr.mxu0 %v136
    %591 = vmatpush1.msra.mxu0 %v135
    %592 = vmatprep.subr.mxu0 %v139
    %593 = vmatpush1.msra.mxu0 %v138
    %594 = vmatprep.subr.mxu0 %v142
    %595 = vmatpush1.msra.mxu0 %v141
    %596 = vmatprep.subr.mxu0 %v145
    %597 = vmatpush1.msra.mxu0 %v144
    %598 = vmatprep.subr.mxu0 %v148
    %599 = vmatpush1.msra.mxu0 %v147
    %600 = vmatprep.subr.mxu0 0.0
    %601 = vmatpush1.msra.mxu0 0.0
    %602 = vmatprep.subr.mxu0 0.0
    %603 = vmatpush1.msra.mxu0 0.0
    %604 = vmatprep.subr.mxu0 0.0
    %605 = vmatpush1.msra.mxu0 0.0
    %606 = vmatprep.subr.mxu0 0.0
    %607 = vmatpush1.msra.mxu0 0.0
    %608 = vmatprep.subr.mxu0 0.0
    %609 = vmatpush1.msra.mxu0 0.0
    %610 = vmatprep.subr.mxu0 0.0
    %611 = vmatpush1.msra.mxu0 0.0
    %612 = vmatprep.subr.mxu0 0.0
    %613 = vmatpush1.msra.mxu0 0.0
    %614 = vmatprep.subr.mxu0 0.0
    %615 = vmatpush1.msra.mxu0 0.0
    %616 = vmatprep.subr.mxu0 0.0
    %617 = vmatpush1.msra.mxu0 0.0
    %618 = vmatprep.subr.mxu0 0.0
    %619 = vmatpush1.msra.mxu0 0.0
    %620 = vmatprep.subr.mxu0 0.0
    %621 = vmatpush1.msra.mxu0 0.0
    %622 = vmatprep.subr.mxu0 0.0
    %623 = vmatpush1.msra.mxu0 0.0
    %624 = vmatprep.subr.mxu0 0.0
    %625 = vmatpush1.msra.mxu0 0.0
    %626 = vmatprep.subr.mxu0 0.0
    %627 = vmatpush1.msra.mxu0 0.0
    %628 = vmatprep.subr.mxu0 0.0
    %629 = vmatpush1.msra.mxu0 0.0
    %630 = vmatprep.subr.mxu0 0.0
    %631 = vmatpush1.msra.mxu0 0.0
    %632 = vmatprep.mubr.f32.mxu0 0.0
    %633 = vmatmul.mubr.f32.gmra.mrb[0].mxu0 %v565
    %v634 = vpop.f32.mrb[0].mxu0
    %v635 = vadd.f32 0.0, %v634
    %v636 = vpop.f32.mrb[0].mxu0
    %v637 = vadd.f32 0.0, %v636
    %638 = vmatprep.mubr.f32.mxu0 0.0
    %639 = vmatmul.mubr.f32.gmra.mrb[0].mxu0 %v566
    %v640 = vpop.f32.mrb[0].mxu0
    %v641 = vadd.f32 0.0, %v640
    %v642 = vpop.f32.mrb[0].mxu0
    %v643 = vadd.f32 0.0, %v642
    %644 = vmatprep.mubr.f32.mxu0 0.0
    %645 = vmatmul.mubr.f32.gmra.mrb[0].mxu0 %v567
    %v646 = vpop.f32.mrb[0].mxu0
    %v647 = vadd.f32 0.0, %v646
    %v648 = vpop.f32.mrb[0].mxu0
    %v649 = vadd.f32 0.0, %v648
    %650 = vdwg.mxu0
    %651 = vmatprep.subr.mxu0 0.0
    %652 = vmatpush1.msra.mxu0 %v104
    %653 = vmatprep.subr.mxu0 0.0
    %654 = vmatpush1.msra.mxu0 %v107
    %655 = vmatprep.subr.mxu0 0.0
    %656 = vmatpush1.msra.mxu0 %v110
    %657 = vmatprep.subr.mxu0 0.0
    %658 = vmatpush1.msra.mxu0 %v113
    %659 = vmatprep.subr.mxu0 0.0
    %660 = vmatpush1.msra.mxu0 %v116
    %661 = vmatprep.subr.mxu0 0.0
    %662 = vmatpush1.msra.mxu0 %v119
    %663 = vmatprep.subr.mxu0 0.0
    %664 = vmatpush1.msra.mxu0 %v122
    %665 = vmatprep.subr.mxu0 0.0
    %666 = vmatpush1.msra.mxu0 %v125
    %667 = vmatprep.subr.mxu0 0.0
    %668 = vmatpush1.msra.mxu0 %v128
    %669 = vmatprep.subr.mxu0 0.0
    %670 = vmatpush1.msra.mxu0 %v131
    %671 = vmatprep.subr.mxu0 0.0
    %672 = vmatpush1.msra.mxu0 %v134
    %673 = vmatprep.subr.mxu0 0.0
    %674 = vmatpush1.msra.mxu0 %v137
    %675 = vmatprep.subr.mxu0 0.0
    %676 = vmatpush1.msra.mxu0 %v140
    %677 = vmatprep.subr.mxu0 0.0
    %678 = vmatpush1.msra.mxu0 %v143
    %679 = vmatprep.subr.mxu0 0.0
    %680 = vmatpush1.msra.mxu0 %v146
    %681 = vmatprep.subr.mxu0 0.0
    %682 = vmatpush1.msra.mxu0 %v149
    %683 = vmatprep.subr.mxu0 0.0
    %684 = vmatpush1.msra.mxu0 0.0
    %685 = vmatprep.subr.mxu0 0.0
    %686 = vmatpush1.msra.mxu0 0.0
    %687 = vmatprep.subr.mxu0 0.0
    %688 = vmatpush1.msra.mxu0 0.0
    %689 = vmatprep.subr.mxu0 0.0
    %690 = vmatpush1.msra.mxu0 0.0
    %691 = vmatprep.subr.mxu0 0.0
    %692 = vmatpush1.msra.mxu0 0.0
    %693 = vmatprep.subr.mxu0 0.0
    %694 = vmatpush1.msra.mxu0 0.0
    %695 = vmatprep.subr.mxu0 0.0
    %696 = vmatpush1.msra.mxu0 0.0
    %697 = vmatprep.subr.mxu0 0.0
    %698 = vmatpush1.msra.mxu0 0.0
    %699 = vmatprep.subr.mxu0 0.0
    %700 = vmatpush1.msra.mxu0 0.0
    %701 = vmatprep.subr.mxu0 0.0
    %702 = vmatpush1.msra.mxu0 0.0
    %703 = vmatprep.subr.mxu0 0.0
    %704 = vmatpush1.msra.mxu0 0.0
    %705 = vmatprep.subr.mxu0 0.0
    %706 = vmatpush1.msra.mxu0 0.0
    %707 = vmatprep.subr.mxu0 0.0
    %708 = vmatpush1.msra.mxu0 0.0
    %709 = vmatprep.subr.mxu0 0.0
    %710 = vmatpush1.msra.mxu0 0.0
    %711 = vmatprep.subr.mxu0 0.0
    %712 = vmatpush1.msra.mxu0 0.0
    %713 = vmatprep.subr.mxu0 0.0
    %714 = vmatpush1.msra.mxu0 0.0
    %715 = vmatprep.mubr.f32.mxu0 0.0
    %716 = vmatmul.mubr.f32.gmra.mrb[0].mxu0 %v565
    %v717 = vpop.f32.mrb[0].mxu0
    %v718 = vadd.f32 0.0, %v717
    %v719 = vpop.f32.mrb[0].mxu0
    %720 = vmatprep.mubr.f32.mxu0 0.0
    %721 = vmatmul.mubr.f32.gmra.mrb[0].mxu0 %v566
    %v722 = vpop.f32.mrb[0].mxu0
    %v723 = vadd.f32 0.0, %v722
    %v724 = vpop.f32.mrb[0].mxu0
    %725 = vmatprep.mubr.f32.mxu0 0.0
    %726 = vmatmul.mubr.f32.gmra.mrb[0].mxu0 %v567
    %v727 = vpop.f32.mrb[0].mxu0
    %v728 = vadd.f32 0.0, %v727
    %v729 = vpop.f32.mrb[0].mxu0
    %730 = vdwg.mxu0
    %v734 = vrot.slane %v635, 7
    %v735 = vrot.slane %v641, 7
    %v736 = vsel %vm32, %v734, %v735
    %v737 = vrot.slane %v647, 7
    %v738 = vsel %vm32, %v735, %v737
    %v742 = vsel %vm32, 0.0, %v734
    %v743 = vadd.f32 %v742, %v637
    %v744 = vadd.f32 %v736, %v643
    %v745 = vadd.f32 %v738, %v649
    %v749 = vrot.slane %v718, 1
    %v750 = vrot.slane %v723, 1
    %v751 = vsel %vm332, %v749, %v750
    %v752 = vrot.slane %v728, 1
    %v753 = vsel %vm332, %v750, %v752
    %v757 = vsel %vm32, %v752, 0.0
    %v758 = vadd.f32 %v743, %v751
    %v759 = vadd.f32 %v744, %v753
    %v760 = vadd.f32 %v745, %v757
    %v761 = vadd.f32 %v758, %v349
    %v762 = vadd.f32 %v759, %v349
    %v763 = vadd.f32 %v760, %v349
    %v764 = vmax.f32 %v761, 0.0
    %v765 = vmax.f32 %v762, 0.0
    %v766 = vmax.f32 %v763, 0.0
    %v767 = vsel %vm360, %v764, 0.0
    %v768 = vsel %vm361, %v765, 0.0
    %v769 = vsel %vm362, %v766, 0.0
    %770 = vmatprep.subr.mxu0 %v103
    %771 = vmatpush1.msra.mxu0 %v102
    %772 = vmatprep.subr.mxu0 %v106
    %773 = vmatpush1.msra.mxu0 %v105
    %774 = vmatprep.subr.mxu0 %v109
    %775 = vmatpush1.msra.mxu0 %v108
    %776 = vmatprep.subr.mxu0 %v112
    %777 = vmatpush1.msra.mxu0 %v111
    %778 = vmatprep.subr.mxu0 %v115
    %779 = vmatpush1.msra.mxu0 %v114
    %780 = vmatprep.subr.mxu0 %v118
    %781 = vmatpush1.msra.mxu0 %v117
    %782 = vmatprep.subr.mxu0 %v121
    %783 = vmatpush1.msra.mxu0 %v120
    %784 = vmatprep.subr.mxu0 %v124
    %785 = vmatpush1.msra.mxu0 %v123
    %786 = vmatprep.subr.mxu0 %v127
    %787 = vmatpush1.msra.mxu0 %v126
    %788 = vmatprep.subr.mxu0 %v130
    %789 = vmatpush1.msra.mxu0 %v129
    %790 = vmatprep.subr.mxu0 %v133
    %791 = vmatpush1.msra.mxu0 %v132
    %792 = vmatprep.subr.mxu0 %v136
    %793 = vmatpush1.msra.mxu0 %v135
    %794 = vmatprep.subr.mxu0 %v139
    %795 = vmatpush1.msra.mxu0 %v138
    %796 = vmatprep.subr.mxu0 %v142
    %797 = vmatpush1.msra.mxu0 %v141
    %798 = vmatprep.subr.mxu0 %v145
    %799 = vmatpush1.msra.mxu0 %v144
    %800 = vmatprep.subr.mxu0 %v148
    %801 = vmatpush1.msra.mxu0 %v147
    %802 = vmatprep.subr.mxu0 0.0
    %803 = vmatpush1.msra.mxu0 0.0
    %804 = vmatprep.subr.mxu0 0.0
    %805 = vmatpush1.msra.mxu0 0.0
    %806 = vmatprep.subr.mxu0 0.0
    %807 = vmatpush1.msra.mxu0 0.0
    %808 = vmatprep.subr.mxu0 0.0
    %809 = vmatpush1.msra.mxu0 0.0
    %810 = vmatprep.subr.mxu0 0.0
    %811 = vmatpush1.msra.mxu0 0.0
    %812 = vmatprep.subr.mxu0 0.0
    %813 = vmatpush1.msra.mxu0 0.0
    %814 = vmatprep.subr.mxu0 0.0
    %815 = vmatpush1.msra.mxu0 0.0
    %816 = vmatprep.subr.mxu0 0.0
    %817 = vmatpush1.msra.mxu0 0.0
    %818 = vmatprep.subr.mxu0 0.0
    %819 = vmatpush1.msra.mxu0 0.0
    %820 = vmatprep.subr.mxu0 0.0
    %821 = vmatpush1.msra.mxu0 0.0
    %822 = vmatprep.subr.mxu0 0.0
    %823 = vmatpush1.msra.mxu0 0.0
    %824 = vmatprep.subr.mxu0 0.0
    %825 = vmatpush1.msra.mxu0 0.0
    %826 = vmatprep.subr.mxu0 0.0
    %827 = vmatpush1.msra.mxu0 0.0
    %828 = vmatprep.subr.mxu0 0.0
    %829 = vmatpush1.msra.mxu0 0.0
    %830 = vmatprep.subr.mxu0 0.0
    %831 = vmatpush1.msra.mxu0 0.0
    %832 = vmatprep.subr.mxu0 0.0
    %833 = vmatpush1.msra.mxu0 0.0
    %834 = vmatprep.mubr.f32.mxu0 0.0
    %835 = vmatmul.mubr.f32.gmra.mrb[0].mxu0 %v767
    %v836 = vpop.f32.mrb[0].mxu0
    %v837 = vadd.f32 0.0, %v836
    %v838 = vpop.f32.mrb[0].mxu0
    %v839 = vadd.f32 0.0, %v838
    %840 = vmatprep.mubr.f32.mxu0 0.0
    %841 = vmatmul.mubr.f32.gmra.mrb[0].mxu0 %v768
    %v842 = vpop.f32.mrb[0].mxu0
    %v843 = vadd.f32 0.0, %v842
    %v844 = vpop.f32.mrb[0].mxu0
    %v845 = vadd.f32 0.0, %v844
    %846 = vmatprep.mubr.f32.mxu0 0.0
    %847 = vmatmul.mubr.f32.gmra.mrb[0].mxu0 %v769
    %v848 = vpop.f32.mrb[0].mxu0
    %v849 = vadd.f32 0.0, %v848
    %v850 = vpop.f32.mrb[0].mxu0
    %v851 = vadd.f32 0.0, %v850
    %852 = vdwg.mxu0
    %853 = vmatprep.subr.mxu0 0.0
    %854 = vmatpush1.msra.mxu0 %v104
    %855 = vmatprep.subr.mxu0 0.0
    %856 = vmatpush1.msra.mxu0 %v107
    %857 = vmatprep.subr.mxu0 0.0
    %858 = vmatpush1.msra.mxu0 %v110
    %859 = vmatprep.subr.mxu0 0.0
    %860 = vmatpush1.msra.mxu0 %v113
    %861 = vmatprep.subr.mxu0 0.0
    %862 = vmatpush1.msra.mxu0 %v116
    %863 = vmatprep.subr.mxu0 0.0
    %864 = vmatpush1.msra.mxu0 %v119
    %865 = vmatprep.subr.mxu0 0.0
    %866 = vmatpush1.msra.mxu0 %v122
    %867 = vmatprep.subr.mxu0 0.0
    %868 = vmatpush1.msra.mxu0 %v125
    %869 = vmatprep.subr.mxu0 0.0
    %870 = vmatpush1.msra.mxu0 %v128
    %871 = vmatprep.subr.mxu0 0.0
    %872 = vmatpush1.msra.mxu0 %v131
    %873 = vmatprep.subr.mxu0 0.0
    %874 = vmatpush1.msra.mxu0 %v134
    %875 = vmatprep.subr.mxu0 0.0
    %876 = vmatpush1.msra.mxu0 %v137
    %877 = vmatprep.subr.mxu0 0.0
    %878 = vmatpush1.msra.mxu0 %v140
    %879 = vmatprep.subr.mxu0 0.0
    %880 = vmatpush1.msra.mxu0 %v143
    %881 = vmatprep.subr.mxu0 0.0
    %882 = vmatpush1.msra.mxu0 %v146
    %883 = vmatprep.subr.mxu0 0.0
    %884 = vmatpush1.msra.mxu0 %v149
    %885 = vmatprep.subr.mxu0 0.0
    %886 = vmatpush1.msra.mxu0 0.0
    %887 = vmatprep.subr.mxu0 0.0
    %888 = vmatpush1.msra.mxu0 0.0
    %889 = vmatprep.subr.mxu0 0.0
    %890 = vmatpush1.msra.mxu0 0.0
    %891 = vmatprep.subr.mxu0 0.0
    %892 = vmatpush1.msra.mxu0 0.0
    %893 = vmatprep.subr.mxu0 0.0
    %894 = vmatpush1.msra.mxu0 0.0
    %895 = vmatprep.subr.mxu0 0.0
    %896 = vmatpush1.msra.mxu0 0.0
    %897 = vmatprep.subr.mxu0 0.0
    %898 = vmatpush1.msra.mxu0 0.0
    %899 = vmatprep.subr.mxu0 0.0
    %900 = vmatpush1.msra.mxu0 0.0
    %901 = vmatprep.subr.mxu0 0.0
    %902 = vmatpush1.msra.mxu0 0.0
    %903 = vmatprep.subr.mxu0 0.0
    %904 = vmatpush1.msra.mxu0 0.0
    %905 = vmatprep.subr.mxu0 0.0
    %906 = vmatpush1.msra.mxu0 0.0
    %907 = vmatprep.subr.mxu0 0.0
    %908 = vmatpush1.msra.mxu0 0.0
    %909 = vmatprep.subr.mxu0 0.0
    %910 = vmatpush1.msra.mxu0 0.0
    %911 = vmatprep.subr.mxu0 0.0
    %912 = vmatpush1.msra.mxu0 0.0
    %913 = vmatprep.subr.mxu0 0.0
    %914 = vmatpush1.msra.mxu0 0.0
    %915 = vmatprep.subr.mxu0 0.0
    %916 = vmatpush1.msra.mxu0 0.0
    %917 = vmatprep.mubr.f32.mxu0 0.0
    %918 = vmatmul.mubr.f32.gmra.mrb[0].mxu0 %v767
    %v919 = vpop.f32.mrb[0].mxu0
    %v920 = vadd.f32 0.0, %v919
    %v921 = vpop.f32.mrb[0].mxu0
    %922 = vmatprep.mubr.f32.mxu0 0.0
    %923 = vmatmul.mubr.f32.gmra.mrb[0].mxu0 %v768
    %v924 = vpop.f32.mrb[0].mxu0
    %v925 = vadd.f32 0.0, %v924
    %v926 = vpop.f32.mrb[0].mxu0
    %927 = vmatprep.mubr.f32.mxu0 0.0
    %928 = vmatmul.mubr.f32.gmra.mrb[0].mxu0 %v769
    %v929 = vpop.f32.mrb[0].mxu0
    %v930 = vadd.f32 0.0, %v929
    %v931 = vpop.f32.mrb[0].mxu0
    %932 = vdwg.mxu0
    %v936 = vrot.slane %v837, 7
    %v937 = vrot.slane %v843, 7
    %v938 = vsel %vm32, %v936, %v937
    %v939 = vrot.slane %v849, 7
    %v940 = vsel %vm32, %v937, %v939
    %v944 = vsel %vm32, 0.0, %v936
    %v945 = vadd.f32 %v944, %v839
    %v946 = vadd.f32 %v938, %v845
    %v947 = vadd.f32 %v940, %v851
    %v951 = vrot.slane %v920, 1
    %v952 = vrot.slane %v925, 1
    %v953 = vsel %vm332, %v951, %v952
    %v954 = vrot.slane %v930, 1
    %v955 = vsel %vm332, %v952, %v954
    %v959 = vsel %vm32, %v954, 0.0
    %v960 = vadd.f32 %v945, %v953
    %v961 = vadd.f32 %v946, %v955
    %v962 = vadd.f32 %v947, %v959
    %v963 = vadd.f32 %v960, %v349
    %v964 = vadd.f32 %v961, %v349
    %v965 = vadd.f32 %v962, %v349
    %v966 = vmax.f32 %v963, 0.0
    %v967 = vmax.f32 %v964, 0.0
    %v968 = vmax.f32 %v965, 0.0
    %v969 = vsel %vm360, %v966, 0.0
    %v970 = vsel %vm361, %v967, 0.0
    %v971 = vsel %vm362, %v968, 0.0
    %972 = vmatprep.subr.mxu0 %v103
    %973 = vmatpush1.msra.mxu0 %v102
    %974 = vmatprep.subr.mxu0 %v106
    %975 = vmatpush1.msra.mxu0 %v105
    %976 = vmatprep.subr.mxu0 %v109
    %977 = vmatpush1.msra.mxu0 %v108
    %978 = vmatprep.subr.mxu0 %v112
    %979 = vmatpush1.msra.mxu0 %v111
    %980 = vmatprep.subr.mxu0 %v115
    %981 = vmatpush1.msra.mxu0 %v114
    %982 = vmatprep.subr.mxu0 %v118
    %983 = vmatpush1.msra.mxu0 %v117
    %984 = vmatprep.subr.mxu0 %v121
    %985 = vmatpush1.msra.mxu0 %v120
    %986 = vmatprep.subr.mxu0 %v124
    %987 = vmatpush1.msra.mxu0 %v123
    %988 = vmatprep.subr.mxu0 %v127
    %989 = vmatpush1.msra.mxu0 %v126
    %990 = vmatprep.subr.mxu0 %v130
    %991 = vmatpush1.msra.mxu0 %v129
    %992 = vmatprep.subr.mxu0 %v133
    %993 = vmatpush1.msra.mxu0 %v132
    %994 = vmatprep.subr.mxu0 %v136
    %995 = vmatpush1.msra.mxu0 %v135
    %996 = vmatprep.subr.mxu0 %v139
    %997 = vmatpush1.msra.mxu0 %v138
    %998 = vmatprep.subr.mxu0 %v142
    %999 = vmatpush1.msra.mxu0 %v141
    %1000 = vmatprep.subr.mxu0 %v145
    %1001 = vmatpush1.msra.mxu0 %v144
    %1002 = vmatprep.subr.mxu0 %v148
    %1003 = vmatpush1.msra.mxu0 %v147
    %1004 = vmatprep.subr.mxu0 0.0
    %1005 = vmatpush1.msra.mxu0 0.0
    %1006 = vmatprep.subr.mxu0 0.0
    %1007 = vmatpush1.msra.mxu0 0.0
    %1008 = vmatprep.subr.mxu0 0.0
    %1009 = vmatpush1.msra.mxu0 0.0
    %1010 = vmatprep.subr.mxu0 0.0
    %1011 = vmatpush1.msra.mxu0 0.0
    %1012 = vmatprep.subr.mxu0 0.0
    %1013 = vmatpush1.msra.mxu0 0.0
    %1014 = vmatprep.subr.mxu0 0.0
    %1015 = vmatpush1.msra.mxu0 0.0
    %1016 = vmatprep.subr.mxu0 0.0
    %1017 = vmatpush1.msra.mxu0 0.0
    %1018 = vmatprep.subr.mxu0 0.0
    %1019 = vmatpush1.msra.mxu0 0.0
    %1020 = vmatprep.subr.mxu0 0.0
    %1021 = vmatpush1.msra.mxu0 0.0
    %1022 = vmatprep.subr.mxu0 0.0
    %1023 = vmatpush1.msra.mxu0 0.0
    %1024 = vmatprep.subr.mxu0 0.0
    %1025 = vmatpush1.msra.mxu0 0.0
    %1026 = vmatprep.subr.mxu0 0.0
    %1027 = vmatpush1.msra.mxu0 0.0
    %1028 = vmatprep.subr.mxu0 0.0
    %1029 = vmatpush1.msra.mxu0 0.0
    %1030 = vmatprep.subr.mxu0 0.0
    %1031 = vmatpush1.msra.mxu0 0.0
    %1032 = vmatprep.subr.mxu0 0.0
    %1033 = vmatpush1.msra.mxu0 0.0
    %1034 = vmatprep.subr.mxu0 0.0
    %1035 = vmatpush1.msra.mxu0 0.0
    %1036 = vmatprep.mubr.f32.mxu0 0.0
    %1037 = vmatmul.mubr.f32.gmra.mrb[0].mxu0 %v969
    %v1038 = vpop.f32.mrb[0].mxu0
    %v1039 = vadd.f32 0.0, %v1038
    %v1040 = vpop.f32.mrb[0].mxu0
    %v1041 = vadd.f32 0.0, %v1040
    %1042 = vmatprep.mubr.f32.mxu0 0.0
    %1043 = vmatmul.mubr.f32.gmra.mrb[0].mxu0 %v970
    %v1044 = vpop.f32.mrb[0].mxu0
    %v1045 = vadd.f32 0.0, %v1044
    %v1046 = vpop.f32.mrb[0].mxu0
    %v1047 = vadd.f32 0.0, %v1046
    %1048 = vmatprep.mubr.f32.mxu0 0.0
    %1049 = vmatmul.mubr.f32.gmra.mrb[0].mxu0 %v971
    %v1050 = vpop.f32.mrb[0].mxu0
    %v1051 = vadd.f32 0.0, %v1050
    %v1052 = vpop.f32.mrb[0].mxu0
    %v1053 = vadd.f32 0.0, %v1052
    %1054 = vdwg.mxu0
    %1055 = vmatprep.subr.mxu0 0.0
    %1056 = vmatpush1.msra.mxu0 %v104
    %1057 = vmatprep.subr.mxu0 0.0
    %1058 = vmatpush1.msra.mxu0 %v107
    %1059 = vmatprep.subr.mxu0 0.0
    %1060 = vmatpush1.msra.mxu0 %v110
    %1061 = vmatprep.subr.mxu0 0.0
    %1062 = vmatpush1.msra.mxu0 %v113
    %1063 = vmatprep.subr.mxu0 0.0
    %1064 = vmatpush1.msra.mxu0 %v116
    %1065 = vmatprep.subr.mxu0 0.0
    %1066 = vmatpush1.msra.mxu0 %v119
    %1067 = vmatprep.subr.mxu0 0.0
    %1068 = vmatpush1.msra.mxu0 %v122
    %1069 = vmatprep.subr.mxu0 0.0
    %1070 = vmatpush1.msra.mxu0 %v125
    %1071 = vmatprep.subr.mxu0 0.0
    %1072 = vmatpush1.msra.mxu0 %v128
    %1073 = vmatprep.subr.mxu0 0.0
    %1074 = vmatpush1.msra.mxu0 %v131
    %1075 = vmatprep.subr.mxu0 0.0
    %1076 = vmatpush1.msra.mxu0 %v134
    %1077 = vmatprep.subr.mxu0 0.0
    %1078 = vmatpush1.msra.mxu0 %v137
    %1079 = vmatprep.subr.mxu0 0.0
    %1080 = vmatpush1.msra.mxu0 %v140
    %1081 = vmatprep.subr.mxu0 0.0
    %1082 = vmatpush1.msra.mxu0 %v143
    %1083 = vmatprep.subr.mxu0 0.0
    %1084 = vmatpush1.msra.mxu0 %v146
    %1085 = vmatprep.subr.mxu0 0.0
    %1086 = vmatpush1.msra.mxu0 %v149
    %1087 = vmatprep.subr.mxu0 0.0
    %1088 = vmatpush1.msra.mxu0 0.0
    %1089 = vmatprep.subr.mxu0 0.0
    %1090 = vmatpush1.msra.mxu0 0.0
    %1091 = vmatprep.subr.mxu0 0.0
    %1092 = vmatpush1.msra.mxu0 0.0
    %1093 = vmatprep.subr.mxu0 0.0
    %1094 = vmatpush1.msra.mxu0 0.0
    %1095 = vmatprep.subr.mxu0 0.0
    %1096 = vmatpush1.msra.mxu0 0.0
    %1097 = vmatprep.subr.mxu0 0.0
    %1098 = vmatpush1.msra.mxu0 0.0
    %1099 = vmatprep.subr.mxu0 0.0
    %1100 = vmatpush1.msra.mxu0 0.0
    %1101 = vmatprep.subr.mxu0 0.0
    %1102 = vmatpush1.msra.mxu0 0.0
    %1103 = vmatprep.subr.mxu0 0.0
    %1104 = vmatpush1.msra.mxu0 0.0
    %1105 = vmatprep.subr.mxu0 0.0
    %1106 = vmatpush1.msra.mxu0 0.0
    %1107 = vmatprep.subr.mxu0 0.0
    %1108 = vmatpush1.msra.mxu0 0.0
    %1109 = vmatprep.subr.mxu0 0.0
    %1110 = vmatpush1.msra.mxu0 0.0
    %1111 = vmatprep.subr.mxu0 0.0
    %1112 = vmatpush1.msra.mxu0 0.0
    %1113 = vmatprep.subr.mxu0 0.0
    %1114 = vmatpush1.msra.mxu0 0.0
    %1115 = vmatprep.subr.mxu0 0.0
    %1116 = vmatpush1.msra.mxu0 0.0
    %1117 = vmatprep.subr.mxu0 0.0
    %1118 = vmatpush1.msra.mxu0 0.0
    %1119 = vmatprep.mubr.f32.mxu0 0.0
    %1120 = vmatmul.mubr.f32.gmra.mrb[0].mxu0 %v969
    %v1121 = vpop.f32.mrb[0].mxu0
    %v1122 = vadd.f32 0.0, %v1121
    %v1123 = vpop.f32.mrb[0].mxu0
    %1124 = vmatprep.mubr.f32.mxu0 0.0
    %1125 = vmatmul.mubr.f32.gmra.mrb[0].mxu0 %v970
    %v1126 = vpop.f32.mrb[0].mxu0
    %v1127 = vadd.f32 0.0, %v1126
    %v1128 = vpop.f32.mrb[0].mxu0
    %1129 = vmatprep.mubr.f32.mxu0 0.0
    %1130 = vmatmul.mubr.f32.gmra.mrb[0].mxu0 %v971
    %v1131 = vpop.f32.mrb[0].mxu0
    %v1132 = vadd.f32 0.0, %v1131
    %v1133 = vpop.f32.mrb[0].mxu0
    %1134 = vdwg.mxu0
    %v1138 = vrot.slane %v1039, 7
    %v1139 = vrot.slane %v1045, 7
    %v1140 = vsel %vm32, %v1138, %v1139
    %v1141 = vrot.slane %v1051, 7
    %v1142 = vsel %vm32, %v1139, %v1141
    %v1146 = vsel %vm32, 0.0, %v1138
    %v1147 = vadd.f32 %v1146, %v1041
    %v1148 = vadd.f32 %v1140, %v1047
    %v1149 = vadd.f32 %v1142, %v1053
    %v1153 = vrot.slane %v1122, 1
    %v1154 = vrot.slane %v1127, 1
    %v1155 = vsel %vm332, %v1153, %v1154
    %v1156 = vrot.slane %v1132, 1
    %v1157 = vsel %vm332, %v1154, %v1156
    %v1161 = vsel %vm32, %v1156, 0.0
    %v1162 = vadd.f32 %v1147, %v1155
    %v1163 = vadd.f32 %v1148, %v1157
    %v1164 = vadd.f32 %v1149, %v1161
    %v1165 = vadd.f32 %v1162, %v349
    %v1166 = vadd.f32 %v1163, %v349
    %v1167 = vadd.f32 %v1164, %v349
    %v1168 = vmax.f32 %v1165, 0.0
    %v1169 = vmax.f32 %v1166, 0.0
    %v1170 = vmax.f32 %v1167, 0.0
    %v1171 = vsel %vm360, %v1168, 0.0
    %v1172 = vsel %vm361, %v1169, 0.0
    %v1173 = vsel %vm362, %v1170, 0.0
    %s1174 = scalar_lea.vmem [#allocation2], 384
    %v1175 = vld [vmem:[%s1174] sm:$0xff]
    %v1176 = vld [vmem:[%s1174 + $0x8] sm:$0xff]
    %v1177 = vld [vmem:[%s1174 + $0x10] sm:$0xff]
    %v1178 = vld [vmem:[%s1174 + $0x18] sm:$0xff]
    %v1179 = vld [vmem:[%s1174 + $0x20] sm:$0xff]
    %v1180 = vld [vmem:[%s1174 + $0x28] sm:$0xff]
    %v1181 = vld [vmem:[%s1174 + $0x30] sm:$0xff]
    %v1182 = vld [vmem:[%s1174 + $0x38] sm:$0xff]
    %v1183 = vld [vmem:[%s1174 + $0x40] sm:$0xff]
    %v1184 = vld [vmem:[%s1174 + $0x48] sm:$0xff]
    %v1185 = vld [vmem:[%s1174 + $0x50] sm:$0xff]
    %v1186 = vld [vmem:[%s1174 + $0x58] sm:$0xff]
    %v1187 = vld [vmem:[%s1174 + $0x60] sm:$0xff]
    %v1188 = vld [vmem:[%s1174 + $0x68] sm:$0xff]
    %v1189 = vld [vmem:[%s1174 + $0x70] sm:$0xff]
    %v1190 = vld [vmem:[%s1174 + $0x78] sm:$0xff]
    %v1191 = vld [vmem:[%s1174 + $0x80] sm:$0xff]
    %v1192 = vld [vmem:[%s1174 + $0x88] sm:$0xff]
    %v1193 = vld [vmem:[%s1174 + $0x90] sm:$0xff]
    %v1194 = vld [vmem:[%s1174 + $0x98] sm:$0xff]
    %v1195 = vld [vmem:[%s1174 + $0xa0] sm:$0xff]
    %v1196 = vld [vmem:[%s1174 + $0xa8] sm:$0xff]
    %v1197 = vld [vmem:[%s1174 + $0xb0] sm:$0xff]
    %v1198 = vld [vmem:[%s1174 + $0xb8] sm:$0xff]
    %v1199 = vld [vmem:[%s1174 + $0xc0] sm:$0xff]
    %v1200 = vld [vmem:[%s1174 + $0xc8] sm:$0xff]
    %v1201 = vld [vmem:[%s1174 + $0xd0] sm:$0xff]
    %v1202 = vld [vmem:[%s1174 + $0xd8] sm:$0xff]
    %v1203 = vld [vmem:[%s1174 + $0xe0] sm:$0xff]
    %v1204 = vld [vmem:[%s1174 + $0xe8] sm:$0xff]
    %v1205 = vld [vmem:[%s1174 + $0xf0] sm:$0xff]
    %v1206 = vld [vmem:[%s1174 + $0xf8] sm:$0xff]
    %v1207 = vld [vmem:[%s1174 + $0x100] sm:$0xff]
    %v1208 = vld [vmem:[%s1174 + $0x108] sm:$0xff]
    %v1209 = vld [vmem:[%s1174 + $0x110] sm:$0xff]
    %v1210 = vld [vmem:[%s1174 + $0x118] sm:$0xff]
    %v1211 = vld [vmem:[%s1174 + $0x120] sm:$0xff]
    %v1212 = vld [vmem:[%s1174 + $0x128] sm:$0xff]
    %v1213 = vld [vmem:[%s1174 + $0x130] sm:$0xff]
    %v1214 = vld [vmem:[%s1174 + $0x138] sm:$0xff]
    %v1215 = vld [vmem:[%s1174 + $0x140] sm:$0xff]
    %v1216 = vld [vmem:[%s1174 + $0x148] sm:$0xff]
    %v1217 = vld [vmem:[%s1174 + $0x150] sm:$0xff]
    %v1218 = vld [vmem:[%s1174 + $0x158] sm:$0xff]
    %v1219 = vld [vmem:[%s1174 + $0x160] sm:$0xff]
    %v1220 = vld [vmem:[%s1174 + $0x168] sm:$0xff]
    %v1221 = vld [vmem:[%s1174 + $0x170] sm:$0xff]
    %v1222 = vld [vmem:[%s1174 + $0x178] sm:$0xff]
    %s1223 = scalar_lea.vmem %s2, 1
    %v1224 = vld [vmem:[%s1223] sm:$0x1]
    %1225 = vmatprep.subr.mxu0 %v1176
    %1226 = vmatpush1.msra.mxu0 %v1175
    %1227 = vmatprep.subr.mxu0 %v1179
    %1228 = vmatpush1.msra.mxu0 %v1178
    %1229 = vmatprep.subr.mxu0 %v1182
    %1230 = vmatpush1.msra.mxu0 %v1181
    %1231 = vmatprep.subr.mxu0 %v1185
    %1232 = vmatpush1.msra.mxu0 %v1184
    %1233 = vmatprep.subr.mxu0 %v1188
    %1234 = vmatpush1.msra.mxu0 %v1187
    %1235 = vmatprep.subr.mxu0 %v1191
    %1236 = vmatpush1.msra.mxu0 %v1190
    %1237 = vmatprep.subr.mxu0 %v1194
    %1238 = vmatpush1.msra.mxu0 %v1193
    %1239 = vmatprep.subr.mxu0 %v1197
    %1240 = vmatpush1.msra.mxu0 %v1196
    %1241 = vmatprep.subr.mxu0 %v1200
    %1242 = vmatpush1.msra.mxu0 %v1199
    %1243 = vmatprep.subr.mxu0 %v1203
    %1244 = vmatpush1.msra.mxu0 %v1202
    %1245 = vmatprep.subr.mxu0 %v1206
    %1246 = vmatpush1.msra.mxu0 %v1205
    %1247 = vmatprep.subr.mxu0 %v1209
    %1248 = vmatpush1.msra.mxu0 %v1208
    %1249 = vmatprep.subr.mxu0 %v1212
    %1250 = vmatpush1.msra.mxu0 %v1211
    %1251 = vmatprep.subr.mxu0 %v1215
    %1252 = vmatpush1.msra.mxu0 %v1214
    %1253 = vmatprep.subr.mxu0 %v1218
    %1254 = vmatpush1.msra.mxu0 %v1217
    %1255 = vmatprep.subr.mxu0 %v1221
    %1256 = vmatpush1.msra.mxu0 %v1220
    %1257 = vmatprep.subr.mxu0 0.0
    %1258 = vmatpush1.msra.mxu0 0.0
    %1259 = vmatprep.subr.mxu0 0.0
    %1260 = vmatpush1.msra.mxu0 0.0
    %1261 = vmatprep.subr.mxu0 0.0
    %1262 = vmatpush1.msra.mxu0 0.0
    %1263 = vmatprep.subr.mxu0 0.0
    %1264 = vmatpush1.msra.mxu0 0.0
    %1265 = vmatprep.subr.mxu0 0.0
    %1266 = vmatpush1.msra.mxu0 0.0
    %1267 = vmatprep.subr.mxu0 0.0
    %1268 = vmatpush1.msra.mxu0 0.0
    %1269 = vmatprep.subr.mxu0 0.0
    %1270 = vmatpush1.msra.mxu0 0.0
    %1271 = vmatprep.subr.mxu0 0.0
    %1272 = vmatpush1.msra.mxu0 0.0
    %1273 = vmatprep.subr.mxu0 0.0
    %1274 = vmatpush1.msra.mxu0 0.0
    %1275 = vmatprep.subr.mxu0 0.0
    %1276 = vmatpush1.msra.mxu0 0.0
    %1277 = vmatprep.subr.mxu0 0.0
    %1278 = vmatpush1.msra.mxu0 0.0
    %1279 = vmatprep.subr.mxu0 0.0
    %1280 = vmatpush1.msra.mxu0 0.0
    %1281 = vmatprep.subr.mxu0 0.0
    %1282 = vmatpush1.msra.mxu0 0.0
    %1283 = vmatprep.subr.mxu0 0.0
    %1284 = vmatpush1.msra.mxu0 0.0
    %1285 = vmatprep.subr.mxu0 0.0
    %1286 = vmatpush1.msra.mxu0 0.0
    %1287 = vmatprep.subr.mxu0 0.0
    %1288 = vmatpush1.msra.mxu0 0.0
    %1289 = vmatprep.mubr.f32.mxu0 0.0
    %1290 = vmatmul.mubr.f32.gmra.mrb[0].mxu0 %v1171
    %v1291 = vpop.f32.mrb[0].mxu0
    %v1292 = vadd.f32 0.0, %v1291
    %v1293 = vpop.f32.mrb[0].mxu0
    %v1294 = vadd.f32 0.0, %v1293
    %1295 = vmatprep.mubr.f32.mxu0 0.0
    %1296 = vmatmul.mubr.f32.gmra.mrb[0].mxu0 %v1172
    %v1297 = vpop.f32.mrb[0].mxu0
    %v1298 = vadd.f32 0.0, %v1297
    %v1299 = vpop.f32.mrb[0].mxu0
    %v1300 = vadd.f32 0.0, %v1299
    %1301 = vmatprep.mubr.f32.mxu0 0.0
    %1302 = vmatmul.mubr.f32.gmra.mrb[0].mxu0 %v1173
    %v1303 = vpop.f32.mrb[0].mxu0
    %v1304 = vadd.f32 0.0, %v1303
    %v1305 = vpop.f32.mrb[0].mxu0
    %v1306 = vadd.f32 0.0, %v1305
    %1307 = vdwg.mxu0
    %1308 = vmatprep.subr.mxu0 0.0
    %1309 = vmatpush1.msra.mxu0 %v1177
    %1310 = vmatprep.subr.mxu0 0.0
    %1311 = vmatpush1.msra.mxu0 %v1180
    %1312 = vmatprep.subr.mxu0 0.0
    %1313 = vmatpush1.msra.mxu0 %v1183
    %1314 = vmatprep.subr.mxu0 0.0
    %1315 = vmatpush1.msra.mxu0 %v1186
    %1316 = vmatprep.subr.mxu0 0.0
    %1317 = vmatpush1.msra.mxu0 %v1189
    %1318 = vmatprep.subr.mxu0 0.0
    %1319 = vmatpush1.msra.mxu0 %v1192
    %1320 = vmatprep.subr.mxu0 0.0
    %1321 = vmatpush1.msra.mxu0 %v1195
    %1322 = vmatprep.subr.mxu0 0.0
    %1323 = vmatpush1.msra.mxu0 %v1198
    %1324 = vmatprep.subr.mxu0 0.0
    %1325 = vmatpush1.msra.mxu0 %v1201
    %1326 = vmatprep.subr.mxu0 0.0
    %1327 = vmatpush1.msra.mxu0 %v1204
    %1328 = vmatprep.subr.mxu0 0.0
    %1329 = vmatpush1.msra.mxu0 %v1207
    %1330 = vmatprep.subr.mxu0 0.0
    %1331 = vmatpush1.msra.mxu0 %v1210
    %1332 = vmatprep.subr.mxu0 0.0
    %1333 = vmatpush1.msra.mxu0 %v1213
    %1334 = vmatprep.subr.mxu0 0.0
    %1335 = vmatpush1.msra.mxu0 %v1216
    %1336 = vmatprep.subr.mxu0 0.0
    %1337 = vmatpush1.msra.mxu0 %v1219
    %1338 = vmatprep.subr.mxu0 0.0
    %1339 = vmatpush1.msra.mxu0 %v1222
    %1340 = vmatprep.subr.mxu0 0.0
    %1341 = vmatpush1.msra.mxu0 0.0
    %1342 = vmatprep.subr.mxu0 0.0
    %1343 = vmatpush1.msra.mxu0 0.0
    %1344 = vmatprep.subr.mxu0 0.0
    %1345 = vmatpush1.msra.mxu0 0.0
    %1346 = vmatprep.subr.mxu0 0.0
    %1347 = vmatpush1.msra.mxu0 0.0
    %1348 = vmatprep.subr.mxu0 0.0
    %1349 = vmatpush1.msra.mxu0 0.0
    %1350 = vmatprep.subr.mxu0 0.0
    %1351 = vmatpush1.msra.mxu0 0.0
    %1352 = vmatprep.subr.mxu0 0.0
    %1353 = vmatpush1.msra.mxu0 0.0
    %1354 = vmatprep.subr.mxu0 0.0
    %1355 = vmatpush1.msra.mxu0 0.0
    %1356 = vmatprep.subr.mxu0 0.0
    %1357 = vmatpush1.msra.mxu0 0.0
    %1358 = vmatprep.subr.mxu0 0.0
    %1359 = vmatpush1.msra.mxu0 0.0
    %1360 = vmatprep.subr.mxu0 0.0
    %1361 = vmatpush1.msra.mxu0 0.0
    %1362 = vmatprep.subr.mxu0 0.0
    %1363 = vmatpush1.msra.mxu0 0.0
    %1364 = vmatprep.subr.mxu0 0.0
    %1365 = vmatpush1.msra.mxu0 0.0
    %1366 = vmatprep.subr.mxu0 0.0
    %1367 = vmatpush1.msra.mxu0 0.0
    %1368 = vmatprep.subr.mxu0 0.0
    %1369 = vmatpush1.msra.mxu0 0.0
    %1370 = vmatprep.subr.mxu0 0.0
    %1371 = vmatpush1.msra.mxu0 0.0
    %1372 = vmatprep.mubr.f32.mxu0 0.0
    %1373 = vmatmul.mubr.f32.gmra.mrb[0].mxu0 %v1171
    %v1374 = vpop.f32.mrb[0].mxu0
    %v1375 = vadd.f32 0.0, %v1374
    %v1376 = vpop.f32.mrb[0].mxu0
    %1377 = vmatprep.mubr.f32.mxu0 0.0
    %1378 = vmatmul.mubr.f32.gmra.mrb[0].mxu0 %v1172
    %v1379 = vpop.f32.mrb[0].mxu0
    %v1380 = vadd.f32 0.0, %v1379
    %v1381 = vpop.f32.mrb[0].mxu0
    %1382 = vmatprep.mubr.f32.mxu0 0.0
    %1383 = vmatmul.mubr.f32.gmra.mrb[0].mxu0 %v1173
    %v1384 = vpop.f32.mrb[0].mxu0
    %v1385 = vadd.f32 0.0, %v1384
    %v1386 = vpop.f32.mrb[0].mxu0
    %1387 = vdwg.mxu0
    %v1391 = vrot.slane %v1292, 7
    %v1392 = vrot.slane %v1298, 7
    %v1393 = vsel %vm32, %v1391, %v1392
    %v1394 = vrot.slane %v1304, 7
    %v1395 = vsel %vm32, %v1392, %v1394
    %v1399 = vsel %vm32, 0.0, %v1391
    %v1400 = vadd.f32 %v1399, %v1294
    %v1401 = vadd.f32 %v1393, %v1300
    %v1402 = vadd.f32 %v1395, %v1306
    %v1406 = vrot.slane %v1375, 1
    %v1407 = vrot.slane %v1380, 1
    %v1408 = vsel %vm332, %v1406, %v1407
    %v1409 = vrot.slane %v1385, 1
    %v1410 = vsel %vm332, %v1407, %v1409
    %v1414 = vsel %vm32, %v1409, 0.0
    %v1415 = vadd.f32 %v1400, %v1408
    %v1416 = vadd.f32 %v1401, %v1410
    %v1417 = vadd.f32 %v1402, %v1414
    %v1419 = vlaneseq
    %v1420 = vshrl.u32 %v1419, 7
    %v1421 = vsub.s32 0, %v1420
    %v1422 = vrot.slane %v1224, %v1421
    %v1424 = vadd.f32 %v1415, %v1422
    %v1425 = vadd.f32 %v1416, %v1422
    %v1426 = vadd.f32 %v1417, %v1422
    %v1427 = vmax.f32 %v1424, 0.0
    %v1428 = vmax.f32 %v1425, 0.0
    %v1429 = vmax.f32 %v1426, 0.0
    %v1430 = vsel %vm360, %v1427, 0.0
    %v1431 = vsel %vm361, %v1428, 0.0
    %v1432 = vsel %vm362, %v1429, 0.0
    %1433 = vmatprep.subr.mxu0 %v1176
    %1434 = vmatpush1.msra.mxu0 %v1175
    %1435 = vmatprep.subr.mxu0 %v1179
    %1436 = vmatpush1.msra.mxu0 %v1178
    %1437 = vmatprep.subr.mxu0 %v1182
    %1438 = vmatpush1.msra.mxu0 %v1181
    %1439 = vmatprep.subr.mxu0 %v1185
    %1440 = vmatpush1.msra.mxu0 %v1184
    %1441 = vmatprep.subr.mxu0 %v1188
    %1442 = vmatpush1.msra.mxu0 %v1187
    %1443 = vmatprep.subr.mxu0 %v1191
    %1444 = vmatpush1.msra.mxu0 %v1190
    %1445 = vmatprep.subr.mxu0 %v1194
    %1446 = vmatpush1.msra.mxu0 %v1193
    %1447 = vmatprep.subr.mxu0 %v1197
    %1448 = vmatpush1.msra.mxu0 %v1196
    %1449 = vmatprep.subr.mxu0 %v1200
    %1450 = vmatpush1.msra.mxu0 %v1199
    %1451 = vmatprep.subr.mxu0 %v1203
    %1452 = vmatpush1.msra.mxu0 %v1202
    %1453 = vmatprep.subr.mxu0 %v1206
    %1454 = vmatpush1.msra.mxu0 %v1205
    %1455 = vmatprep.subr.mxu0 %v1209
    %1456 = vmatpush1.msra.mxu0 %v1208
    %1457 = vmatprep.subr.mxu0 %v1212
    %1458 = vmatpush1.msra.mxu0 %v1211
    %1459 = vmatprep.subr.mxu0 %v1215
    %1460 = vmatpush1.msra.mxu0 %v1214
    %1461 = vmatprep.subr.mxu0 %v1218
    %1462 = vmatpush1.msra.mxu0 %v1217
    %1463 = vmatprep.subr.mxu0 %v1221
    %1464 = vmatpush1.msra.mxu0 %v1220
    %1465 = vmatprep.subr.mxu0 0.0
    %1466 = vmatpush1.msra.mxu0 0.0
    %1467 = vmatprep.subr.mxu0 0.0
    %1468 = vmatpush1.msra.mxu0 0.0
    %1469 = vmatprep.subr.mxu0 0.0
    %1470 = vmatpush1.msra.mxu0 0.0
    %1471 = vmatprep.subr.mxu0 0.0
    %1472 = vmatpush1.msra.mxu0 0.0
    %1473 = vmatprep.subr.mxu0 0.0
    %1474 = vmatpush1.msra.mxu0 0.0
    %1475 = vmatprep.subr.mxu0 0.0
    %1476 = vmatpush1.msra.mxu0 0.0
    %1477 = vmatprep.subr.mxu0 0.0
    %1478 = vmatpush1.msra.mxu0 0.0
    %1479 = vmatprep.subr.mxu0 0.0
    %1480 = vmatpush1.msra.mxu0 0.0
    %1481 = vmatprep.subr.mxu0 0.0
    %1482 = vmatpush1.msra.mxu0 0.0
    %1483 = vmatprep.subr.mxu0 0.0
    %1484 = vmatpush1.msra.mxu0 0.0
    %1485 = vmatprep.subr.mxu0 0.0
    %1486 = vmatpush1.msra.mxu0 0.0
    %1487 = vmatprep.subr.mxu0 0.0
    %1488 = vmatpush1.msra.mxu0 0.0
    %1489 = vmatprep.subr.mxu0 0.0
    %1490 = vmatpush1.msra.mxu0 0.0
    %1491 = vmatprep.subr.mxu0 0.0
    %1492 = vmatpush1.msra.mxu0 0.0
    %1493 = vmatprep.subr.mxu0 0.0
    %1494 = vmatpush1.msra.mxu0 0.0
    %1495 = vmatprep.subr.mxu0 0.0
    %1496 = vmatpush1.msra.mxu0 0.0
    %1497 = vmatprep.mubr.f32.mxu0 0.0
    %1498 = vmatmul.mubr.f32.gmra.mrb[0].mxu0 %v1430
    %v1499 = vpop.f32.mrb[0].mxu0
    %v1500 = vadd.f32 0.0, %v1499
    %v1501 = vpop.f32.mrb[0].mxu0
    %v1502 = vadd.f32 0.0, %v1501
    %1503 = vmatprep.mubr.f32.mxu0 0.0
    %1504 = vmatmul.mubr.f32.gmra.mrb[0].mxu0 %v1431
    %v1505 = vpop.f32.mrb[0].mxu0
    %v1506 = vadd.f32 0.0, %v1505
    %v1507 = vpop.f32.mrb[0].mxu0
    %v1508 = vadd.f32 0.0, %v1507
    %1509 = vmatprep.mubr.f32.mxu0 0.0
    %1510 = vmatmul.mubr.f32.gmra.mrb[0].mxu0 %v1432
    %v1511 = vpop.f32.mrb[0].mxu0
    %v1512 = vadd.f32 0.0, %v1511
    %v1513 = vpop.f32.mrb[0].mxu0
    %v1514 = vadd.f32 0.0, %v1513
    %1515 = vdwg.mxu0
    %1516 = vmatprep.subr.mxu0 0.0
    %1517 = vmatpush1.msra.mxu0 %v1177
    %1518 = vmatprep.subr.mxu0 0.0
    %1519 = vmatpush1.msra.mxu0 %v1180
    %1520 = vmatprep.subr.mxu0 0.0
    %1521 = vmatpush1.msra.mxu0 %v1183
    %1522 = vmatprep.subr.mxu0 0.0
    %1523 = vmatpush1.msra.mxu0 %v1186
    %1524 = vmatprep.subr.mxu0 0.0
    %1525 = vmatpush1.msra.mxu0 %v1189
    %1526 = vmatprep.subr.mxu0 0.0
    %1527 = vmatpush1.msra.mxu0 %v1192
    %1528 = vmatprep.subr.mxu0 0.0
    %1529 = vmatpush1.msra.mxu0 %v1195
    %1530 = vmatprep.subr.mxu0 0.0
    %1531 = vmatpush1.msra.mxu0 %v1198
    %1532 = vmatprep.subr.mxu0 0.0
    %1533 = vmatpush1.msra.mxu0 %v1201
    %1534 = vmatprep.subr.mxu0 0.0
    %1535 = vmatpush1.msra.mxu0 %v1204
    %1536 = vmatprep.subr.mxu0 0.0
    %1537 = vmatpush1.msra.mxu0 %v1207
    %1538 = vmatprep.subr.mxu0 0.0
    %1539 = vmatpush1.msra.mxu0 %v1210
    %1540 = vmatprep.subr.mxu0 0.0
    %1541 = vmatpush1.msra.mxu0 %v1213
    %1542 = vmatprep.subr.mxu0 0.0
    %1543 = vmatpush1.msra.mxu0 %v1216
    %1544 = vmatprep.subr.mxu0 0.0
    %1545 = vmatpush1.msra.mxu0 %v1219
    %1546 = vmatprep.subr.mxu0 0.0
    %1547 = vmatpush1.msra.mxu0 %v1222
    %1548 = vmatprep.subr.mxu0 0.0
    %1549 = vmatpush1.msra.mxu0 0.0
    %1550 = vmatprep.subr.mxu0 0.0
    %1551 = vmatpush1.msra.mxu0 0.0
    %1552 = vmatprep.subr.mxu0 0.0
    %1553 = vmatpush1.msra.mxu0 0.0
    %1554 = vmatprep.subr.mxu0 0.0
    %1555 = vmatpush1.msra.mxu0 0.0
    %1556 = vmatprep.subr.mxu0 0.0
    %1557 = vmatpush1.msra.mxu0 0.0
    %1558 = vmatprep.subr.mxu0 0.0
    %1559 = vmatpush1.msra.mxu0 0.0
    %1560 = vmatprep.subr.mxu0 0.0
    %1561 = vmatpush1.msra.mxu0 0.0
    %1562 = vmatprep.subr.mxu0 0.0
    %1563 = vmatpush1.msra.mxu0 0.0
    %1564 = vmatprep.subr.mxu0 0.0
    %1565 = vmatpush1.msra.mxu0 0.0
    %1566 = vmatprep.subr.mxu0 0.0
    %1567 = vmatpush1.msra.mxu0 0.0
    %1568 = vmatprep.subr.mxu0 0.0
    %1569 = vmatpush1.msra.mxu0 0.0
    %1570 = vmatprep.subr.mxu0 0.0
    %1571 = vmatpush1.msra.mxu0 0.0
    %1572 = vmatprep.subr.mxu0 0.0
    %1573 = vmatpush1.msra.mxu0 0.0
    %1574 = vmatprep.subr.mxu0 0.0
    %1575 = vmatpush1.msra.mxu0 0.0
    %1576 = vmatprep.subr.mxu0 0.0
    %1577 = vmatpush1.msra.mxu0 0.0
    %1578 = vmatprep.subr.mxu0 0.0
    %1579 = vmatpush1.msra.mxu0 0.0
    %1580 = vmatprep.mubr.f32.mxu0 0.0
    %1581 = vmatmul.mubr.f32.gmra.mrb[0].mxu0 %v1430
    %v1582 = vpop.f32.mrb[0].mxu0
    %v1583 = vadd.f32 0.0, %v1582
    %v1584 = vpop.f32.mrb[0].mxu0
    %1585 = vmatprep.mubr.f32.mxu0 0.0
    %1586 = vmatmul.mubr.f32.gmra.mrb[0].mxu0 %v1431
    %v1587 = vpop.f32.mrb[0].mxu0
    %v1588 = vadd.f32 0.0, %v1587
    %v1589 = vpop.f32.mrb[0].mxu0
    %1590 = vmatprep.mubr.f32.mxu0 0.0
    %1591 = vmatmul.mubr.f32.gmra.mrb[0].mxu0 %v1432
    %v1592 = vpop.f32.mrb[0].mxu0
    %v1593 = vadd.f32 0.0, %v1592
    %v1594 = vpop.f32.mrb[0].mxu0
    %1595 = vdwg.mxu0
    %v1599 = vrot.slane %v1500, 7
    %v1600 = vrot.slane %v1506, 7
    %v1601 = vsel %vm32, %v1599, %v1600
    %v1602 = vrot.slane %v1512, 7
    %v1603 = vsel %vm32, %v1600, %v1602
    %v1607 = vsel %vm32, 0.0, %v1599
    %v1608 = vadd.f32 %v1607, %v1502
    %v1609 = vadd.f32 %v1601, %v1508
    %v1610 = vadd.f32 %v1603, %v1514
    %v1614 = vrot.slane %v1583, 1
    %v1615 = vrot.slane %v1588, 1
    %v1616 = vsel %vm332, %v1614, %v1615
    %v1617 = vrot.slane %v1593, 1
    %v1618 = vsel %vm332, %v1615, %v1617
    %v1622 = vsel %vm32, %v1617, 0.0
    %v1623 = vadd.f32 %v1608, %v1616
    %v1624 = vadd.f32 %v1609, %v1618
    %v1625 = vadd.f32 %v1610, %v1622
    %v1626 = vadd.f32 %v1623, %v1422
    %v1627 = vadd.f32 %v1624, %v1422
    %v1628 = vadd.f32 %v1625, %v1422
    %v1629 = vmax.f32 %v1626, 0.0
    %v1630 = vmax.f32 %v1627, 0.0
    %v1631 = vmax.f32 %v1628, 0.0
    %v1632 = vsel %vm360, %v1629, 0.0
    %v1633 = vsel %vm361, %v1630, 0.0
    %v1634 = vsel %vm362, %v1631, 0.0
    %1635 = vmatprep.subr.mxu0 %v1176
    %1636 = vmatpush1.msra.mxu0 %v1175
    %1637 = vmatprep.subr.mxu0 %v1179
    %1638 = vmatpush1.msra.mxu0 %v1178
    %1639 = vmatprep.subr.mxu0 %v1182
    %1640 = vmatpush1.msra.mxu0 %v1181
    %1641 = vmatprep.subr.mxu0 %v1185
    %1642 = vmatpush1.msra.mxu0 %v1184
    %1643 = vmatprep.subr.mxu0 %v1188
    %1644 = vmatpush1.msra.mxu0 %v1187
    %1645 = vmatprep.subr.mxu0 %v1191
    %1646 = vmatpush1.msra.mxu0 %v1190
    %1647 = vmatprep.subr.mxu0 %v1194
    %1648 = vmatpush1.msra.mxu0 %v1193
    %1649 = vmatprep.subr.mxu0 %v1197
    %1650 = vmatpush1.msra.mxu0 %v1196
    %1651 = vmatprep.subr.mxu0 %v1200
    %1652 = vmatpush1.msra.mxu0 %v1199
    %1653 = vmatprep.subr.mxu0 %v1203
    %1654 = vmatpush1.msra.mxu0 %v1202
    %1655 = vmatprep.subr.mxu0 %v1206
    %1656 = vmatpush1.msra.mxu0 %v1205
    %1657 = vmatprep.subr.mxu0 %v1209
    %1658 = vmatpush1.msra.mxu0 %v1208
    %1659 = vmatprep.subr.mxu0 %v1212
    %1660 = vmatpush1.msra.mxu0 %v1211
    %1661 = vmatprep.subr.mxu0 %v1215
    %1662 = vmatpush1.msra.mxu0 %v1214
    %1663 = vmatprep.subr.mxu0 %v1218
    %1664 = vmatpush1.msra.mxu0 %v1217
    %1665 = vmatprep.subr.mxu0 %v1221
    %1666 = vmatpush1.msra.mxu0 %v1220
    %1667 = vmatprep.subr.mxu0 0.0
    %1668 = vmatpush1.msra.mxu0 0.0
    %1669 = vmatprep.subr.mxu0 0.0
    %1670 = vmatpush1.msra.mxu0 0.0
    %1671 = vmatprep.subr.mxu0 0.0
    %1672 = vmatpush1.msra.mxu0 0.0
    %1673 = vmatprep.subr.mxu0 0.0
    %1674 = vmatpush1.msra.mxu0 0.0
    %1675 = vmatprep.subr.mxu0 0.0
    %1676 = vmatpush1.msra.mxu0 0.0
    %1677 = vmatprep.subr.mxu0 0.0
    %1678 = vmatpush1.msra.mxu0 0.0
    %1679 = vmatprep.subr.mxu0 0.0
    %1680 = vmatpush1.msra.mxu0 0.0
    %1681 = vmatprep.subr.mxu0 0.0
    %1682 = vmatpush1.msra.mxu0 0.0
    %1683 = vmatprep.subr.mxu0 0.0
    %1684 = vmatpush1.msra.mxu0 0.0
    %1685 = vmatprep.subr.mxu0 0.0
    %1686 = vmatpush1.msra.mxu0 0.0
    %1687 = vmatprep.subr.mxu0 0.0
    %1688 = vmatpush1.msra.mxu0 0.0
    %1689 = vmatprep.subr.mxu0 0.0
    %1690 = vmatpush1.msra.mxu0 0.0
    %1691 = vmatprep.subr.mxu0 0.0
    %1692 = vmatpush1.msra.mxu0 0.0
    %1693 = vmatprep.subr.mxu0 0.0
    %1694 = vmatpush1.msra.mxu0 0.0
    %1695 = vmatprep.subr.mxu0 0.0
    %1696 = vmatpush1.msra.mxu0 0.0
    %1697 = vmatprep.subr.mxu0 0.0
    %1698 = vmatpush1.msra.mxu0 0.0
    %1699 = vmatprep.mubr.f32.mxu0 0.0
    %1700 = vmatmul.mubr.f32.gmra.mrb[0].mxu0 %v1632
    %v1701 = vpop.f32.mrb[0].mxu0
    %v1702 = vadd.f32 0.0, %v1701
    %v1703 = vpop.f32.mrb[0].mxu0
    %v1704 = vadd.f32 0.0, %v1703
    %1705 = vmatprep.mubr.f32.mxu0 0.0
    %1706 = vmatmul.mubr.f32.gmra.mrb[0].mxu0 %v1633
    %v1707 = vpop.f32.mrb[0].mxu0
    %v1708 = vadd.f32 0.0, %v1707
    %v1709 = vpop.f32.mrb[0].mxu0
    %v1710 = vadd.f32 0.0, %v1709
    %1711 = vmatprep.mubr.f32.mxu0 0.0
    %1712 = vmatmul.mubr.f32.gmra.mrb[0].mxu0 %v1634
    %v1713 = vpop.f32.mrb[0].mxu0
    %v1714 = vadd.f32 0.0, %v1713
    %v1715 = vpop.f32.mrb[0].mxu0
    %v1716 = vadd.f32 0.0, %v1715
    %1717 = vdwg.mxu0
    %1718 = vmatprep.subr.mxu0 0.0
    %1719 = vmatpush1.msra.mxu0 %v1177
    %1720 = vmatprep.subr.mxu0 0.0
    %1721 = vmatpush1.msra.mxu0 %v1180
    %1722 = vmatprep.subr.mxu0 0.0
    %1723 = vmatpush1.msra.mxu0 %v1183
    %1724 = vmatprep.subr.mxu0 0.0
    %1725 = vmatpush1.msra.mxu0 %v1186
    %1726 = vmatprep.subr.mxu0 0.0
    %1727 = vmatpush1.msra.mxu0 %v1189
    %1728 = vmatprep.subr.mxu0 0.0
    %1729 = vmatpush1.msra.mxu0 %v1192
    %1730 = vmatprep.subr.mxu0 0.0
    %1731 = vmatpush1.msra.mxu0 %v1195
    %1732 = vmatprep.subr.mxu0 0.0
    %1733 = vmatpush1.msra.mxu0 %v1198
    %1734 = vmatprep.subr.mxu0 0.0
    %1735 = vmatpush1.msra.mxu0 %v1201
    %1736 = vmatprep.subr.mxu0 0.0
    %1737 = vmatpush1.msra.mxu0 %v1204
    %1738 = vmatprep.subr.mxu0 0.0
    %1739 = vmatpush1.msra.mxu0 %v1207
    %1740 = vmatprep.subr.mxu0 0.0
    %1741 = vmatpush1.msra.mxu0 %v1210
    %1742 = vmatprep.subr.mxu0 0.0
    %1743 = vmatpush1.msra.mxu0 %v1213
    %1744 = vmatprep.subr.mxu0 0.0
    %1745 = vmatpush1.msra.mxu0 %v1216
    %1746 = vmatprep.subr.mxu0 0.0
    %1747 = vmatpush1.msra.mxu0 %v1219
    %1748 = vmatprep.subr.mxu0 0.0
    %1749 = vmatpush1.msra.mxu0 %v1222
    %1750 = vmatprep.subr.mxu0 0.0
    %1751 = vmatpush1.msra.mxu0 0.0
    %1752 = vmatprep.subr.mxu0 0.0
    %1753 = vmatpush1.msra.mxu0 0.0
    %1754 = vmatprep.subr.mxu0 0.0
    %1755 = vmatpush1.msra.mxu0 0.0
    %1756 = vmatprep.subr.mxu0 0.0
    %1757 = vmatpush1.msra.mxu0 0.0
    %1758 = vmatprep.subr.mxu0 0.0
    %1759 = vmatpush1.msra.mxu0 0.0
    %1760 = vmatprep.subr.mxu0 0.0
    %1761 = vmatpush1.msra.mxu0 0.0
    %1762 = vmatprep.subr.mxu0 0.0
    %1763 = vmatpush1.msra.mxu0 0.0
    %1764 = vmatprep.subr.mxu0 0.0
    %1765 = vmatpush1.msra.mxu0 0.0
    %1766 = vmatprep.subr.mxu0 0.0
    %1767 = vmatpush1.msra.mxu0 0.0
    %1768 = vmatprep.subr.mxu0 0.0
    %1769 = vmatpush1.msra.mxu0 0.0
    %1770 = vmatprep.subr.mxu0 0.0
    %1771 = vmatpush1.msra.mxu0 0.0
    %1772 = vmatprep.subr.mxu0 0.0
    %1773 = vmatpush1.msra.mxu0 0.0
    %1774 = vmatprep.subr.mxu0 0.0
    %1775 = vmatpush1.msra.mxu0 0.0
    %1776 = vmatprep.subr.mxu0 0.0
    %1777 = vmatpush1.msra.mxu0 0.0
    %1778 = vmatprep.subr.mxu0 0.0
    %1779 = vmatpush1.msra.mxu0 0.0
    %1780 = vmatprep.subr.mxu0 0.0
    %1781 = vmatpush1.msra.mxu0 0.0
    %1782 = vmatprep.mubr.f32.mxu0 0.0
    %1783 = vmatmul.mubr.f32.gmra.mrb[0].mxu0 %v1632
    %v1784 = vpop.f32.mrb[0].mxu0
    %v1785 = vadd.f32 0.0, %v1784
    %v1786 = vpop.f32.mrb[0].mxu0
    %1787 = vmatprep.mubr.f32.mxu0 0.0
    %1788 = vmatmul.mubr.f32.gmra.mrb[0].mxu0 %v1633
    %v1789 = vpop.f32.mrb[0].mxu0
    %v1790 = vadd.f32 0.0, %v1789
    %v1791 = vpop.f32.mrb[0].mxu0
    %1792 = vmatprep.mubr.f32.mxu0 0.0
    %1793 = vmatmul.mubr.f32.gmra.mrb[0].mxu0 %v1634
    %v1794 = vpop.f32.mrb[0].mxu0
    %v1795 = vadd.f32 0.0, %v1794
    %v1796 = vpop.f32.mrb[0].mxu0
    %1797 = vdwg.mxu0
    %v1801 = vrot.slane %v1702, 7
    %v1802 = vrot.slane %v1708, 7
    %v1803 = vsel %vm32, %v1801, %v1802
    %v1804 = vrot.slane %v1714, 7
    %v1805 = vsel %vm32, %v1802, %v1804
    %v1809 = vsel %vm32, 0.0, %v1801
    %v1810 = vadd.f32 %v1809, %v1704
    %v1811 = vadd.f32 %v1803, %v1710
    %v1812 = vadd.f32 %v1805, %v1716
    %v1816 = vrot.slane %v1785, 1
    %v1817 = vrot.slane %v1790, 1
    %v1818 = vsel %vm332, %v1816, %v1817
    %v1819 = vrot.slane %v1795, 1
    %v1820 = vsel %vm332, %v1817, %v1819
    %v1824 = vsel %vm32, %v1819, 0.0
    %v1825 = vadd.f32 %v1810, %v1818
    %v1826 = vadd.f32 %v1811, %v1820
    %v1827 = vadd.f32 %v1812, %v1824
    %v1828 = vadd.f32 %v1825, %v1422
    %v1829 = vadd.f32 %v1826, %v1422
    %v1830 = vadd.f32 %v1827, %v1422
    %v1831 = vmax.f32 %v1828, 0.0
    %v1832 = vmax.f32 %v1829, 0.0
    %v1833 = vmax.f32 %v1830, 0.0
    %v1834 = vsel %vm360, %v1831, 0.0
    %v1835 = vsel %vm361, %v1832, 0.0
    %v1836 = vsel %vm362, %v1833, 0.0
    %1837 = vmatprep.subr.mxu0 %v1176
    %1838 = vmatpush1.msra.mxu0 %v1175
    %1839 = vmatprep.subr.mxu0 %v1179
    %1840 = vmatpush1.msra.mxu0 %v1178
    %1841 = vmatprep.subr.mxu0 %v1182
    %1842 = vmatpush1.msra.mxu0 %v1181
    %1843 = vmatprep.subr.mxu0 %v1185
    %1844 = vmatpush1.msra.mxu0 %v1184
    %1845 = vmatprep.subr.mxu0 %v1188
    %1846 = vmatpush1.msra.mxu0 %v1187
    %1847 = vmatprep.subr.mxu0 %v1191
    %1848 = vmatpush1.msra.mxu0 %v1190
    %1849 = vmatprep.subr.mxu0 %v1194
    %1850 = vmatpush1.msra.mxu0 %v1193
    %1851 = vmatprep.subr.mxu0 %v1197
    %1852 = vmatpush1.msra.mxu0 %v1196
    %1853 = vmatprep.subr.mxu0 %v1200
    %1854 = vmatpush1.msra.mxu0 %v1199
    %1855 = vmatprep.subr.mxu0 %v1203
    %1856 = vmatpush1.msra.mxu0 %v1202
    %1857 = vmatprep.subr.mxu0 %v1206
    %1858 = vmatpush1.msra.mxu0 %v1205
    %1859 = vmatprep.subr.mxu0 %v1209
    %1860 = vmatpush1.msra.mxu0 %v1208
    %1861 = vmatprep.subr.mxu0 %v1212
    %1862 = vmatpush1.msra.mxu0 %v1211
    %1863 = vmatprep.subr.mxu0 %v1215
    %1864 = vmatpush1.msra.mxu0 %v1214
    %1865 = vmatprep.subr.mxu0 %v1218
    %1866 = vmatpush1.msra.mxu0 %v1217
    %1867 = vmatprep.subr.mxu0 %v1221
    %1868 = vmatpush1.msra.mxu0 %v1220
    %1869 = vmatprep.subr.mxu0 0.0
    %1870 = vmatpush1.msra.mxu0 0.0
    %1871 = vmatprep.subr.mxu0 0.0
    %1872 = vmatpush1.msra.mxu0 0.0
    %1873 = vmatprep.subr.mxu0 0.0
    %1874 = vmatpush1.msra.mxu0 0.0
    %1875 = vmatprep.subr.mxu0 0.0
    %1876 = vmatpush1.msra.mxu0 0.0
    %1877 = vmatprep.subr.mxu0 0.0
    %1878 = vmatpush1.msra.mxu0 0.0
    %1879 = vmatprep.subr.mxu0 0.0
    %1880 = vmatpush1.msra.mxu0 0.0
    %1881 = vmatprep.subr.mxu0 0.0
    %1882 = vmatpush1.msra.mxu0 0.0
    %1883 = vmatprep.subr.mxu0 0.0
    %1884 = vmatpush1.msra.mxu0 0.0
    %1885 = vmatprep.subr.mxu0 0.0
    %1886 = vmatpush1.msra.mxu0 0.0
    %1887 = vmatprep.subr.mxu0 0.0
    %1888 = vmatpush1.msra.mxu0 0.0
    %1889 = vmatprep.subr.mxu0 0.0
    %1890 = vmatpush1.msra.mxu0 0.0
    %1891 = vmatprep.subr.mxu0 0.0
    %1892 = vmatpush1.msra.mxu0 0.0
    %1893 = vmatprep.subr.mxu0 0.0
    %1894 = vmatpush1.msra.mxu0 0.0
    %1895 = vmatprep.subr.mxu0 0.0
    %1896 = vmatpush1.msra.mxu0 0.0
    %1897 = vmatprep.subr.mxu0 0.0
    %1898 = vmatpush1.msra.mxu0 0.0
    %1899 = vmatprep.subr.mxu0 0.0
    %1900 = vmatpush1.msra.mxu0 0.0
    %1901 = vmatprep.mubr.f32.mxu0 0.0
    %1902 = vmatmul.mubr.f32.gmra.mrb[0].mxu0 %v1834
    %v1903 = vpop.f32.mrb[0].mxu0
    %v1904 = vadd.f32 0.0, %v1903
    %v1905 = vpop.f32.mrb[0].mxu0
    %v1906 = vadd.f32 0.0, %v1905
    %1907 = vmatprep.mubr.f32.mxu0 0.0
    %1908 = vmatmul.mubr.f32.gmra.mrb[0].mxu0 %v1835
    %v1909 = vpop.f32.mrb[0].mxu0
    %v1910 = vadd.f32 0.0, %v1909
    %v1911 = vpop.f32.mrb[0].mxu0
    %v1912 = vadd.f32 0.0, %v1911
    %1913 = vmatprep.mubr.f32.mxu0 0.0
    %1914 = vmatmul.mubr.f32.gmra.mrb[0].mxu0 %v1836
    %v1915 = vpop.f32.mrb[0].mxu0
    %v1916 = vadd.f32 0.0, %v1915
    %v1917 = vpop.f32.mrb[0].mxu0
    %v1918 = vadd.f32 0.0, %v1917
    %1919 = vdwg.mxu0
    %1920 = vmatprep.subr.mxu0 0.0
    %1921 = vmatpush1.msra.mxu0 %v1177
    %1922 = vmatprep.subr.mxu0 0.0
    %1923 = vmatpush1.msra.mxu0 %v1180
    %1924 = vmatprep.subr.mxu0 0.0
    %1925 = vmatpush1.msra.mxu0 %v1183
    %1926 = vmatprep.subr.mxu0 0.0
    %1927 = vmatpush1.msra.mxu0 %v1186
    %1928 = vmatprep.subr.mxu0 0.0
    %1929 = vmatpush1.msra.mxu0 %v1189
    %1930 = vmatprep.subr.mxu0 0.0
    %1931 = vmatpush1.msra.mxu0 %v1192
    %1932 = vmatprep.subr.mxu0 0.0
    %1933 = vmatpush1.msra.mxu0 %v1195
    %1934 = vmatprep.subr.mxu0 0.0
    %1935 = vmatpush1.msra.mxu0 %v1198
    %1936 = vmatprep.subr.mxu0 0.0
    %1937 = vmatpush1.msra.mxu0 %v1201
    %1938 = vmatprep.subr.mxu0 0.0
    %1939 = vmatpush1.msra.mxu0 %v1204
    %1940 = vmatprep.subr.mxu0 0.0
    %1941 = vmatpush1.msra.mxu0 %v1207
    %1942 = vmatprep.subr.mxu0 0.0
    %1943 = vmatpush1.msra.mxu0 %v1210
    %1944 = vmatprep.subr.mxu0 0.0
    %1945 = vmatpush1.msra.mxu0 %v1213
    %1946 = vmatprep.subr.mxu0 0.0
    %1947 = vmatpush1.msra.mxu0 %v1216
    %1948 = vmatprep.subr.mxu0 0.0
    %1949 = vmatpush1.msra.mxu0 %v1219
    %1950 = vmatprep.subr.mxu0 0.0
    %1951 = vmatpush1.msra.mxu0 %v1222
    %1952 = vmatprep.subr.mxu0 0.0
    %1953 = vmatpush1.msra.mxu0 0.0
    %1954 = vmatprep.subr.mxu0 0.0
    %1955 = vmatpush1.msra.mxu0 0.0
    %1956 = vmatprep.subr.mxu0 0.0
    %1957 = vmatpush1.msra.mxu0 0.0
    %1958 = vmatprep.subr.mxu0 0.0
    %1959 = vmatpush1.msra.mxu0 0.0
    %1960 = vmatprep.subr.mxu0 0.0
    %1961 = vmatpush1.msra.mxu0 0.0
    %1962 = vmatprep.subr.mxu0 0.0
    %1963 = vmatpush1.msra.mxu0 0.0
    %1964 = vmatprep.subr.mxu0 0.0
    %1965 = vmatpush1.msra.mxu0 0.0
    %1966 = vmatprep.subr.mxu0 0.0
    %1967 = vmatpush1.msra.mxu0 0.0
    %1968 = vmatprep.subr.mxu0 0.0
    %1969 = vmatpush1.msra.mxu0 0.0
    %1970 = vmatprep.subr.mxu0 0.0
    %1971 = vmatpush1.msra.mxu0 0.0
    %1972 = vmatprep.subr.mxu0 0.0
    %1973 = vmatpush1.msra.mxu0 0.0
    %1974 = vmatprep.subr.mxu0 0.0
    %1975 = vmatpush1.msra.mxu0 0.0
    %1976 = vmatprep.subr.mxu0 0.0
    %1977 = vmatpush1.msra.mxu0 0.0
    %1978 = vmatprep.subr.mxu0 0.0
    %1979 = vmatpush1.msra.mxu0 0.0
    %1980 = vmatprep.subr.mxu0 0.0
    %1981 = vmatpush1.msra.mxu0 0.0
    %1982 = vmatprep.subr.mxu0 0.0
    %1983 = vmatpush1.msra.mxu0 0.0
    %1984 = vmatprep.mubr.f32.mxu0 0.0
    %1985 = vmatmul.mubr.f32.gmra.mrb[0].mxu0 %v1834
    %v1986 = vpop.f32.mrb[0].mxu0
    %v1987 = vadd.f32 0.0, %v1986
    %v1988 = vpop.f32.mrb[0].mxu0
    %1989 = vmatprep.mubr.f32.mxu0 0.0
    %1990 = vmatmul.mubr.f32.gmra.mrb[0].mxu0 %v1835
    %v1991 = vpop.f32.mrb[0].mxu0
    %v1992 = vadd.f32 0.0, %v1991
    %v1993 = vpop.f32.mrb[0].mxu0
    %1994 = vmatprep.mubr.f32.mxu0 0.0
    %1995 = vmatmul.mubr.f32.gmra.mrb[0].mxu0 %v1836
    %v1996 = vpop.f32.mrb[0].mxu0
    %v1997 = vadd.f32 0.0, %v1996
    %v1998 = vpop.f32.mrb[0].mxu0
    %1999 = vdwg.mxu0
    %v2003 = vrot.slane %v1904, 7
    %v2004 = vrot.slane %v1910, 7
    %v2005 = vsel %vm32, %v2003, %v2004
    %v2006 = vrot.slane %v1916, 7
    %v2007 = vsel %vm32, %v2004, %v2006
    %v2011 = vsel %vm32, 0.0, %v2003
    %v2012 = vadd.f32 %v2011, %v1906
    %v2013 = vadd.f32 %v2005, %v1912
    %v2014 = vadd.f32 %v2007, %v1918
    %v2018 = vrot.slane %v1987, 1
    %v2019 = vrot.slane %v1992, 1
    %v2020 = vsel %vm332, %v2018, %v2019
    %v2021 = vrot.slane %v1997, 1
    %v2022 = vsel %vm332, %v2019, %v2021
    %v2026 = vsel %vm32, %v2021, 0.0
    %v2027 = vadd.f32 %v2012, %v2020
    %v2028 = vadd.f32 %v2013, %v2022
    %v2029 = vadd.f32 %v2014, %v2026
    %v2030 = vadd.f32 %v2027, %v1422
    %v2031 = vadd.f32 %v2028, %v1422
    %v2032 = vadd.f32 %v2029, %v1422
    %v2033 = vmax.f32 %v2030, 0.0
    %v2034 = vmax.f32 %v2031, 0.0
    %v2035 = vmax.f32 %v2032, 0.0
    %v2036 = vsel %vm360, %v2033, 0.0
    %v2037 = vsel %vm361, %v2034, 0.0
    %v2038 = vsel %vm362, %v2035, 0.0
    %2039 = vmatprep.subr.mxu0 %v1176
    %2040 = vmatpush1.msra.mxu0 %v1175
    %2041 = vmatprep.subr.mxu0 %v1179
    %2042 = vmatpush1.msra.mxu0 %v1178
    %2043 = vmatprep.subr.mxu0 %v1182
    %2044 = vmatpush1.msra.mxu0 %v1181
    %2045 = vmatprep.subr.mxu0 %v1185
    %2046 = vmatpush1.msra.mxu0 %v1184
    %2047 = vmatprep.subr.mxu0 %v1188
    %2048 = vmatpush1.msra.mxu0 %v1187
    %2049 = vmatprep.subr.mxu0 %v1191
    %2050 = vmatpush1.msra.mxu0 %v1190
    %2051 = vmatprep.subr.mxu0 %v1194
    %2052 = vmatpush1.msra.mxu0 %v1193
    %2053 = vmatprep.subr.mxu0 %v1197
    %2054 = vmatpush1.msra.mxu0 %v1196
    %2055 = vmatprep.subr.mxu0 %v1200
    %2056 = vmatpush1.msra.mxu0 %v1199
    %2057 = vmatprep.subr.mxu0 %v1203
    %2058 = vmatpush1.msra.mxu0 %v1202
    %2059 = vmatprep.subr.mxu0 %v1206
    %2060 = vmatpush1.msra.mxu0 %v1205
    %2061 = vmatprep.subr.mxu0 %v1209
    %2062 = vmatpush1.msra.mxu0 %v1208
    %2063 = vmatprep.subr.mxu0 %v1212
    %2064 = vmatpush1.msra.mxu0 %v1211
    %2065 = vmatprep.subr.mxu0 %v1215
    %2066 = vmatpush1.msra.mxu0 %v1214
    %2067 = vmatprep.subr.mxu0 %v1218
    %2068 = vmatpush1.msra.mxu0 %v1217
    %2069 = vmatprep.subr.mxu0 %v1221
    %2070 = vmatpush1.msra.mxu0 %v1220
    %2071 = vmatprep.subr.mxu0 0.0
    %2072 = vmatpush1.msra.mxu0 0.0
    %2073 = vmatprep.subr.mxu0 0.0
    %2074 = vmatpush1.msra.mxu0 0.0
    %2075 = vmatprep.subr.mxu0 0.0
    %2076 = vmatpush1.msra.mxu0 0.0
    %2077 = vmatprep.subr.mxu0 0.0
    %2078 = vmatpush1.msra.mxu0 0.0
    %2079 = vmatprep.subr.mxu0 0.0
    %2080 = vmatpush1.msra.mxu0 0.0
    %2081 = vmatprep.subr.mxu0 0.0
    %2082 = vmatpush1.msra.mxu0 0.0
    %2083 = vmatprep.subr.mxu0 0.0
    %2084 = vmatpush1.msra.mxu0 0.0
    %2085 = vmatprep.subr.mxu0 0.0
    %2086 = vmatpush1.msra.mxu0 0.0
    %2087 = vmatprep.subr.mxu0 0.0
    %2088 = vmatpush1.msra.mxu0 0.0
    %2089 = vmatprep.subr.mxu0 0.0
    %2090 = vmatpush1.msra.mxu0 0.0
    %2091 = vmatprep.subr.mxu0 0.0
    %2092 = vmatpush1.msra.mxu0 0.0
    %2093 = vmatprep.subr.mxu0 0.0
    %2094 = vmatpush1.msra.mxu0 0.0
    %2095 = vmatprep.subr.mxu0 0.0
    %2096 = vmatpush1.msra.mxu0 0.0
    %2097 = vmatprep.subr.mxu0 0.0
    %2098 = vmatpush1.msra.mxu0 0.0
    %2099 = vmatprep.subr.mxu0 0.0
    %2100 = vmatpush1.msra.mxu0 0.0
    %2101 = vmatprep.subr.mxu0 0.0
    %2102 = vmatpush1.msra.mxu0 0.0
    %2103 = vmatprep.mubr.f32.mxu0 0.0
    %2104 = vmatmul.mubr.f32.gmra.mrb[0].mxu0 %v2036
    %v2105 = vpop.f32.mrb[0].mxu0
    %v2106 = vadd.f32 0.0, %v2105
    %v2107 = vpop.f32.mrb[0].mxu0
    %v2108 = vadd.f32 0.0, %v2107
    %2109 = vmatprep.mubr.f32.mxu0 0.0
    %2110 = vmatmul.mubr.f32.gmra.mrb[0].mxu0 %v2037
    %v2111 = vpop.f32.mrb[0].mxu0
    %v2112 = vadd.f32 0.0, %v2111
    %v2113 = vpop.f32.mrb[0].mxu0
    %v2114 = vadd.f32 0.0, %v2113
    %2115 = vmatprep.mubr.f32.mxu0 0.0
    %2116 = vmatmul.mubr.f32.gmra.mrb[0].mxu0 %v2038
    %v2117 = vpop.f32.mrb[0].mxu0
    %v2118 = vadd.f32 0.0, %v2117
    %v2119 = vpop.f32.mrb[0].mxu0
    %v2120 = vadd.f32 0.0, %v2119
    %2121 = vdwg.mxu0
    %2122 = vmatprep.subr.mxu0 0.0
    %2123 = vmatpush1.msra.mxu0 %v1177
    %2124 = vmatprep.subr.mxu0 0.0
    %2125 = vmatpush1.msra.mxu0 %v1180
    %2126 = vmatprep.subr.mxu0 0.0
    %2127 = vmatpush1.msra.mxu0 %v1183
    %2128 = vmatprep.subr.mxu0 0.0
    %2129 = vmatpush1.msra.mxu0 %v1186
    %2130 = vmatprep.subr.mxu0 0.0
    %2131 = vmatpush1.msra.mxu0 %v1189
    %2132 = vmatprep.subr.mxu0 0.0
    %2133 = vmatpush1.msra.mxu0 %v1192
    %2134 = vmatprep.subr.mxu0 0.0
    %2135 = vmatpush1.msra.mxu0 %v1195
    %2136 = vmatprep.subr.mxu0 0.0
    %2137 = vmatpush1.msra.mxu0 %v1198
    %2138 = vmatprep.subr.mxu0 0.0
    %2139 = vmatpush1.msra.mxu0 %v1201
    %2140 = vmatprep.subr.mxu0 0.0
    %2141 = vmatpush1.msra.mxu0 %v1204
    %2142 = vmatprep.subr.mxu0 0.0
    %2143 = vmatpush1.msra.mxu0 %v1207
    %2144 = vmatprep.subr.mxu0 0.0
    %2145 = vmatpush1.msra.mxu0 %v1210
    %2146 = vmatprep.subr.mxu0 0.0
    %2147 = vmatpush1.msra.mxu0 %v1213
    %2148 = vmatprep.subr.mxu0 0.0
    %2149 = vmatpush1.msra.mxu0 %v1216
    %2150 = vmatprep.subr.mxu0 0.0
    %2151 = vmatpush1.msra.mxu0 %v1219
    %2152 = vmatprep.subr.mxu0 0.0
    %2153 = vmatpush1.msra.mxu0 %v1222
    %2154 = vmatprep.subr.mxu0 0.0
    %2155 = vmatpush1.msra.mxu0 0.0
    %2156 = vmatprep.subr.mxu0 0.0
    %2157 = vmatpush1.msra.mxu0 0.0
    %2158 = vmatprep.subr.mxu0 0.0
    %2159 = vmatpush1.msra.mxu0 0.0
    %2160 = vmatprep.subr.mxu0 0.0
    %2161 = vmatpush1.msra.mxu0 0.0
    %2162 = vmatprep.subr.mxu0 0.0
    %2163 = vmatpush1.msra.mxu0 0.0
    %2164 = vmatprep.subr.mxu0 0.0
    %2165 = vmatpush1.msra.mxu0 0.0
    %2166 = vmatprep.subr.mxu0 0.0
    %2167 = vmatpush1.msra.mxu0 0.0
    %2168 = vmatprep.subr.mxu0 0.0
    %2169 = vmatpush1.msra.mxu0 0.0
    %2170 = vmatprep.subr.mxu0 0.0
    %2171 = vmatpush1.msra.mxu0 0.0
    %2172 = vmatprep.subr.mxu0 0.0
    %2173 = vmatpush1.msra.mxu0 0.0
    %2174 = vmatprep.subr.mxu0 0.0
    %2175 = vmatpush1.msra.mxu0 0.0
    %2176 = vmatprep.subr.mxu0 0.0
    %2177 = vmatpush1.msra.mxu0 0.0
    %2178 = vmatprep.subr.mxu0 0.0
    %2179 = vmatpush1.msra.mxu0 0.0
    %2180 = vmatprep.subr.mxu0 0.0
    %2181 = vmatpush1.msra.mxu0 0.0
    %2182 = vmatprep.subr.mxu0 0.0
    %2183 = vmatpush1.msra.mxu0 0.0
    %2184 = vmatprep.subr.mxu0 0.0
    %2185 = vmatpush1.msra.mxu0 0.0
    %2186 = vmatprep.mubr.f32.mxu0 0.0
    %2187 = vmatmul.mubr.f32.gmra.mrb[0].mxu0 %v2036
    %v2188 = vpop.f32.mrb[0].mxu0
    %v2189 = vadd.f32 0.0, %v2188
    %v2190 = vpop.f32.mrb[0].mxu0
    %2191 = vmatprep.mubr.f32.mxu0 0.0
    %2192 = vmatmul.mubr.f32.gmra.mrb[0].mxu0 %v2037
    %v2193 = vpop.f32.mrb[0].mxu0
    %v2194 = vadd.f32 0.0, %v2193
    %v2195 = vpop.f32.mrb[0].mxu0
    %2196 = vmatprep.mubr.f32.mxu0 0.0
    %2197 = vmatmul.mubr.f32.gmra.mrb[0].mxu0 %v2038
    %v2198 = vpop.f32.mrb[0].mxu0
    %v2199 = vadd.f32 0.0, %v2198
    %v2200 = vpop.f32.mrb[0].mxu0
    %2201 = vdwg.mxu0
    %v2205 = vrot.slane %v2106, 7
    %v2206 = vrot.slane %v2112, 7
    %v2207 = vsel %vm32, %v2205, %v2206
    %v2208 = vrot.slane %v2118, 7
    %v2209 = vsel %vm32, %v2206, %v2208
    %v2213 = vsel %vm32, 0.0, %v2205
    %v2214 = vadd.f32 %v2213, %v2108
    %v2215 = vadd.f32 %v2207, %v2114
    %v2216 = vadd.f32 %v2209, %v2120
    %v2220 = vrot.slane %v2189, 1
    %v2221 = vrot.slane %v2194, 1
    %v2222 = vsel %vm332, %v2220, %v2221
    %v2223 = vrot.slane %v2199, 1
    %v2224 = vsel %vm332, %v2221, %v2223
    %v2228 = vsel %vm32, %v2223, 0.0
    %v2229 = vadd.f32 %v2214, %v2222
    %v2230 = vadd.f32 %v2215, %v2224
    %v2231 = vadd.f32 %v2216, %v2228
    %v2232 = vadd.f32 %v2229, %v1422
    %v2233 = vadd.f32 %v2230, %v1422
    %v2234 = vadd.f32 %v2231, %v1422
    %v2235 = vmax.f32 %v2232, 0.0
    %v2236 = vmax.f32 %v2233, 0.0
    %v2237 = vmax.f32 %v2234, 0.0
    %v2238 = vsel %vm360, %v2235, 0.0
    %v2239 = vsel %vm361, %v2236, 0.0
    %v2240 = vsel %vm362, %v2237, 0.0
    %2241 = vst [vmem:[%s3 - $0x1] sm:$0xfe] %v2238
    %2242 = vst [vmem:[%s3 + $0x7] sm:$0xff] %v2239
    %2243 = vst [vmem:[%s3 + $0xf] sm:$0x1] %v2240
    // Predicated region
    $region18: #{hierarchical_ddn_forward.1} parent=1 // pred_check
      _
    $region19: #{hierarchical_ddn_forward.1} parent=1 // pred_check_branch
      %2245 = sbr.rel (0) target = $region21
    $region20: #{hierarchical_ddn_forward.1} parent=1 // pred_region
      _
    $region21: #{hierarchical_ddn_forward.1} parent=1 // pred_fallthru
      _
    // Predicated region
    $region22: #{hierarchical_ddn_forward.1} parent=1 // pred_check
      _
    $region23: #{hierarchical_ddn_forward.1} parent=1 // pred_check_branch
      %2247 = sbr.rel (0) target = $region25
    $region24: #{hierarchical_ddn_forward.1} parent=1 // pred_region
      _
    $region25: #{hierarchical_ddn_forward.1} parent=1 // pred_fallthru
      _
    %2248 = vsyncpa [#allocation3], 1

</llo_original>
